<compile_context>
chip_gen: v6e
topology: v6e:2x2x1
jax: 0.10.0
libtpu: 0.0.40
codegen_flags: <defaults>
</compile_context>

<pallas_src>
import jax
import jax.numpy as jnp
from jax import lax
from jax.experimental import pallas as pl
from jax.experimental.pallas import tpu as pltpu


def _round_up(x, m):
    return ((x + m - 1) // m) * m


def _relation_kernel(emb_ref, sidx_ref, eidx_ref, lbl_ref,
                     wctab_ref, wa_ref, wb_ref, b1_ref, w2_ref, b2_ref,
                     wb1_ref, bb1_ref, wb2_ref, bb2_ref, wbig_ref,
                     out_ref):
    f32 = jnp.float32
    Bt, S, E = emb_ref.shape
    N = sidx_ref.shape[1]
    Vne = wctab_ref.shape[0]
    Hp = wb1_ref.shape[1]               # padded augmented biaffine hidden (mult. of 128)
    RHp = wbig_ref.shape[1]             # R * Hp
    R = RHp // Hp
    Np = out_ref.shape[2]               # lane-dense padded "j" dim (multiple of 128)
    M = Bt * N
    cdt = emb_ref.dtype                 # MXU operand dtype (bfloat16 or float32)

    # ---- fused span-endpoint gather: ONE (2M, Bt*S) x (Bt*S, E) matmul ---------------
    # Flat token index b*S + idx; any index outside [0, S) maps to the sentinel -1 so a
    # padded span gathers an all-zero row (same semantics as a per-batch one-hot;
    # torch.gather would read real data instead).
    # TODO(synk): at production S (>=512) switch emb to memory_space=pl.ANY + scalar
    # prefetch and DMA-gather only the 2N endpoint rows instead of streaming (Bt, S, E).
    bidx = lax.broadcasted_iota(jnp.int32, (Bt, N, 1), 0)

    def flat_idx(idx_ref):
        idx = idx_ref[...]
        valid = (idx >= 0) & (idx < S)
        return jnp.where(valid, bidx * S + idx, -1).reshape(M, 1)

    flat_se = jnp.concatenate([flat_idx(sidx_ref), flat_idx(eidx_ref)], axis=0)  # (2M,1)
    iota_tok = lax.broadcasted_iota(jnp.int32, (2 * M, Bt * S), 1)
    oh_se = (iota_tok == flat_se).astype(cdt)                            # (2M, Bt*S)
    emb_flat = emb_ref[...].reshape(Bt * S, E)
    se = jnp.dot(oh_se, emb_flat, preferred_element_type=f32)            # (2M, E) f32
    start_f = se[:M].astype(cdt)                                         # (M, E)
    end_f = se[M:].astype(cdt)

    # ---- NE-label contribution: onehot @ (ne_table @ wc), folded in the wrapper ------
    iota_v = lax.broadcasted_iota(jnp.int32, (M, Vne), 1)
    oh_lbl = (iota_v == lbl_ref[...].reshape(M, 1)).astype(cdt)          # (M, Vne)

    # ---- span MLP: torch.cat([start, end, label]) @ W1 as three partial matmuls ------
    h = (jnp.dot(start_f, wa_ref[...], preferred_element_type=f32)
         + jnp.dot(end_f, wb_ref[...], preferred_element_type=f32)
         + jnp.dot(oh_lbl, wctab_ref[...], preferred_element_type=f32)
         + b1_ref[...])
    h = jnp.maximum(h, 0.0).astype(cdt)                                  # (M, H1)
    span = jnp.dot(h, w2_ref[...], preferred_element_type=f32) + b2_ref[...]
    span = jnp.maximum(span, 0.0).astype(cdt)                            # (M, D)

    # ---- DeepBiaffine projections; the Bilinear "+1" augmentation is folded into the
    #      weights (extra column with bias 1 -> relu(1) == 1; zero-padded to Hp lanes).
    h1a = jnp.maximum(jnp.dot(span, wb1_ref[...], preferred_element_type=f32)
                      + bb1_ref[...], 0.0).astype(cdt)                   # (M, Hp)
    h2a = jnp.maximum(jnp.dot(span, wb2_ref[...], preferred_element_type=f32)
                      + bb2_ref[...], 0.0).astype(cdt)                   # (M, Hp)

    # ---- fused bilinear: ONE wide matmul produces all R relation channels ------------
    # t[(b,i), r*Hp + q] = sum_k h1a[(b,i), k] * W_bilin_aug[r, k, q]   (bias folded in)
    t = jnp.dot(h1a, wbig_ref[...], preferred_element_type=f32).astype(cdt)  # (M, R*Hp)
    t3 = t.reshape(Bt, N * R, Hp)           # free row-major split; row index = i*R + r

    # ---- pairwise scores: single batched matmul, lane-dense (>=128-wide) store -------
    h2a3 = h2a.reshape(Bt, N, Hp)
    if Np > N:                              # zero-pad j; padded columns score 0
        h2a3 = jnp.concatenate([h2a3, jnp.zeros((Bt, Np - N, Hp), cdt)], axis=1)
    out_ref[...] = jnp.einsum("brq,bjq->brj", t3, h2a3,
                              preferred_element_type=f32)                # (Bt, N*R, Np)


def _prepare_weights(params, compute_dtype):
    """Precompute kernel weights: fold ne_table@wc, fold the DeepBiaffine '+1'
    augmentation and nn.Bilinear bias into the weights, and pad the augmented hidden
    dim to a multiple of 128 lanes so the per-channel columns of the fused bilinear
    output stay vreg-aligned (pad ratio ~1.17x at production biaff_hidden_dim=768)."""
    f32 = jnp.float32
    D, Hb = params["wb1"].shape
    R = params["w_bilin"].shape[0]
    Ha = Hb + 1
    Hp = _round_up(Ha, 128)

    def aug(w, b):
        w_aug = jnp.zeros((D, Hp), f32).at[:, :Hb].set(w.astype(f32))
        b_aug = jnp.zeros((1, Hp), f32).at[:, :Hb].set(b.astype(f32)).at[:, Hb].set(1.0)
        return w_aug, b_aug

    wb1_aug, bb1_aug = aug(params["wb1"], params["bb1"])
    wb2_aug, bb2_aug = aug(params["wb2"], params["bb2"])

    # nn.Bilinear bias folded into the ("+1", "+1") corner of each relation's weight.
    wbil = params["w_bilin"].astype(f32)
    wbil = wbil.at[:, Hb, Hb].add(params["bilin_bias"].astype(f32))
    # wbig[k, r*Hp + q] = wbil[r, k, q], zero-padded to (Hp, R*Hp)
    wbig_core = jnp.transpose(wbil, (1, 0, 2))                         # (Ha, R, Ha)
    wbig_core = jnp.pad(wbig_core, ((0, 0), (0, 0), (0, Hp - Ha)))     # (Ha, R, Hp)
    wbig = jnp.zeros((Hp, R * Hp), f32).at[:Ha, :].set(wbig_core.reshape(Ha, R * Hp))

    # NE-label chain folded:  onehot @ ne_table @ wc  ==  onehot @ (ne_table @ wc)
    wc_tab = jnp.dot(params["ne_table"].astype(f32), params["wc"].astype(f32))

    def c(x):  # MXU operand dtype; biases stay f32
        return x.astype(compute_dtype)

    weights = [c(wc_tab), c(params["wa"]), c(params["wb"]), params["b1"].astype(f32),
               c(params["w2"]), params["b2"].astype(f32),
               c(wb1_aug), bb1_aug, c(wb2_aug), bb2_aug, c(wbig)]
    return weights, Hp


def relation_parser_forward(emb, seq_lens, ne_pos, ne_labels, params,
                            *, compute_dtype=jnp.bfloat16, batch_tile=None):
    """Returns edge_scores with the PyTorch layout (B, N, N, R)."""
    B, S, E = emb.shape
    N = ne_pos.shape[1]
    R = params["w_bilin"].shape[0]
    Vne = params["ne_table"].shape[0]
    H1 = params["wa"].shape[1]
    D = params["w2"].shape[1]

    # glue: ne_pos encodes start*seq_len + end (torch floor-div / remainder); guard
    # against zero-length padded sentences.
    sl = jnp.maximum(seq_lens.astype(jnp.int32), 1)[:, None]
    sidx = (ne_pos.astype(jnp.int32) // sl)[..., None]                    # (B, N, 1)
    eidx = (ne_pos.astype(jnp.int32) % sl)[..., None]                     # (B, N, 1)
    lbl = ne_labels.astype(jnp.int32)[..., None]                          # (B, N, 1)
    emb_c = emb.astype(compute_dtype)

    # Target ~256 MXU rows per grid step (v6e/v7x MXU is 256 wide) but keep >= 2 grid
    # steps whenever B >= 2 so ("parallel",) can shard the batch axis across both v7x
    # TensorCores.  Per-step VMEM here is far below the scoped default; at production
    # S/E either shrink batch_tile, raise vmem_limit_bytes, or use the DMA row gather.
    if batch_tile is None:
        batch_tile = max(1, min(B, 256 // max(N, 1)))
        while batch_tile > 1 and -(-B // batch_tile) < 2:
            batch_tile //= 2
    Bp = _round_up(B, batch_tile)
    if Bp != B:
        pad = Bp - B
        emb_c = jnp.pad(emb_c, ((0, pad), (0, 0), (0, 0)))
        sidx = jnp.pad(sidx, ((0, pad), (0, 0), (0, 0)))
        eidx = jnp.pad(eidx, ((0, pad), (0, 0), (0, 0)))
        lbl = jnp.pad(lbl, ((0, pad), (0, 0), (0, 0)))

    weights, Hp = _prepare_weights(params, compute_dtype)
    Np = _round_up(N, 128)            # lane-dense output: last dim a multiple of 128

    def batch_spec(trailing):
        shape = (batch_tile,) + tuple(trailing)
        nd = len(shape)
        return pl.BlockSpec(shape, lambda b, nd=nd: (b,) + (0,) * (nd - 1))

    def const_spec(w):
        # Block index never changes -> fetched once.  If weights grow enough to pressure
        # v7x's 64 MiB VMEM, add pipeline_mode=pl.Buffered(1) here.
        nd = w.ndim
        return pl.BlockSpec(w.shape, lambda b, nd=nd: (0,) * nd)

    in_specs = ([batch_spec((S, E)), batch_spec((N, 1)), batch_spec((N, 1)),
                 batch_spec((N, 1))] + [const_spec(w) for w in weights])

    # advisory cost hint so XLA can overlap neighbouring ops with the custom call
    grid_steps = Bp // batch_tile
    m_step = batch_tile * N
    flops_step = 2 * (2 * m_step * batch_tile * S * E        # fused endpoint gather
                      + m_step * Vne * H1                    # label contribution
                      + 2 * m_step * E * H1                  # start / end projections
                      + m_step * H1 * D                      # span MLP layer 2
                      + 2 * m_step * D * Hp                  # biaffine projections
                      + m_step * Hp * R * Hp                 # fused bilinear
                      + batch_tile * N * R * Hp * Np)        # pairwise scores
    bytes_accessed = (int(emb_c.size) * emb_c.dtype.itemsize
                      + 3 * Bp * N * 4
                      + sum(int(w.size) * w.dtype.itemsize for w in weights)
                      + Bp * N * R * Np * 4)

    out = pl.pallas_call(
        _relation_kernel,
        out_shape=jax.ShapeDtypeStruct((Bp, N * R, Np), jnp.float32),
        grid=(grid_steps,),
        in_specs=in_specs,
        out_specs=pl.BlockSpec((batch_tile, N * R, Np), lambda b: (b, 0, 0)),
        compiler_params=pltpu.CompilerParams(
            # independent batch tiles -> shard across both TensorCores on v7x
            dimension_semantics=("parallel",)),
        cost_estimate=pl.CostEstimate(flops=int(grid_steps * flops_step),
                                      transcendentals=0,
                                      bytes_accessed=int(bytes_accessed)),
    )(emb_c, sidx, eidx, lbl, *weights)

    # (Bp, N*R, Np): slice padding, free row-major split to (B, N, R, N), then one small
    # transpose of the trailing axes gives the PyTorch edge_scores layout (B, N, N, R).
    out = out[:B, :, :N].reshape(B, N, R, N)
    return jnp.transpose(out, (0, 1, 3, 2))


def init_params(key, E, L, Vne, H1, D, Hb, R):
    ks = jax.random.split(key, 13)

    def rnd(k, shape, fan_in):
        return jax.random.normal(k, shape, jnp.float32) / jnp.sqrt(jnp.float32(fan_in))

    p = {}
    p["ne_table"] = rnd(ks[0], (Vne, L), 1.0)              # nn.Embedding ~ N(0,1)
    p["wa"] = rnd(ks[1], (E, H1), 2 * E + L)               # span_mlp[0].weight (split)
    p["wb"] = rnd(ks[2], (E, H1), 2 * E + L)
    p["wc"] = rnd(ks[3], (L, H1), 2 * E + L)
    p["b1"] = rnd(ks[4], (1, H1), H1)
    p["w2"] = rnd(ks[5], (H1, D), H1)                      # span_mlp[2]
    p["b2"] = rnd(ks[6], (1, D), D)
    p["wb1"] = rnd(ks[7], (D, Hb), D)                      # DeepBiaffine W1
    p["bb1"] = rnd(ks[8], (1, Hb), Hb)
    p["wb2"] = rnd(ks[9], (D, Hb), D)                      # DeepBiaffine W2
    p["bb2"] = rnd(ks[10], (1, Hb), Hb)
    p["w_bilin"] = rnd(ks[11], (R, Hb + 1, Hb + 1), Hb)    # nn.Bilinear weight
    p["bilin_bias"] = rnd(ks[12], (R,), Hb)                # nn.Bilinear bias
    return p


def reference_forward(emb, seq_lens, ne_pos, ne_labels, params):
    """Plain-JAX reference mirroring the PyTorch forward (evaluation path)."""
    B, S, E = emb.shape
    N = ne_pos.shape[1]
    sl = seq_lens[:, None]
    sidx = ne_pos // sl
    eidx = ne_pos % sl
    start_emb = jnp.take_along_axis(
        emb, jnp.broadcast_to(sidx[:, :, None], (B, N, E)), axis=1)
    end_emb = jnp.take_along_axis(
        emb, jnp.broadcast_to(eidx[:, :, None], (B, N, E)), axis=1)
    lbl_emb = params["ne_table"][ne_labels]
    h = (start_emb @ params["wa"] + end_emb @ params["wb"]
         + lbl_emb @ params["wc"] + params["b1"])
    h = jax.nn.relu(h)
    span = jax.nn.relu(h @ params["w2"] + params["b2"])
    h1 = jax.nn.relu(span @ params["wb1"] + params["bb1"])
    h2 = jax.nn.relu(span @ params["wb2"] + params["bb2"])
    ones = jnp.ones((B, N, 1), jnp.float32)
    h1a = jnp.concatenate([h1, ones], axis=-1)
    h2a = jnp.concatenate([h2, ones], axis=-1)
    scores = jnp.einsum("bip,opq,bjq->bijo", h1a, params["w_bilin"], h2a)
    return scores + params["bilin_bias"]


if __name__ == "__main__":
    # small shapes consistent with the module's forward
    B, S, E = 2, 16, 32          # batch, padded seq len, transformer embedding dim
    Vne, L = 11, 16              # NE vocab size, ne_label_embedding_dim
    N = 8                        # padded_num_ne
    H1, D = 64, 32               # span_repr_hidden_dim, span_repr_out_dim
    Hb = 32                      # biaff_hidden_dim
    R = 7                        # len(rel_vocab)

    root = jax.random.PRNGKey(0)
    k_param, k_emb, k_len, k_s, k_e, k_lbl = jax.random.split(root, 6)
    params = init_params(k_param, E, L, Vne, H1, D, Hb, R)

    # synthetic "self.embed(input_sents)" outputs + NE metadata
    emb = jax.random.normal(k_emb, (B, S, E), jnp.float32)
    seq_lens = jax.random.randint(k_len, (B,), S // 2, S + 1).astype(jnp.int32)
    starts = jax.random.randint(k_s, (B, N), 0, 1 << 20) % seq_lens[:, None]
    ends = jax.random.randint(k_e, (B, N), 0, 1 << 20) % seq_lens[:, None]
    ne_pos = (starts * seq_lens[:, None] + ends).astype(jnp.int32)        # start*len + end
    ne_labels = jax.random.randint(k_lbl, (B, N), 0, Vne).astype(jnp.int32)

    ref = reference_forward(emb, seq_lens, ne_pos, ne_labels, params)
    scale = float(jnp.max(jnp.abs(ref))) + 1e-6

    # f32 compute path: validates the fused/augmented math independent of bf16 rounding
    out_f32 = relation_parser_forward(emb, seq_lens, ne_pos, ne_labels, params,
                                      compute_dtype=jnp.float32)
    out_f32 = jax.block_until_ready(out_f32)
    assert out_f32.shape == (B, N, N, R)
    err32 = float(jnp.max(jnp.abs(out_f32 - ref)))
    assert err32 <= 3e-2 * scale + 3e-2, f"f32 path max abs err {err32} (scale {scale})"

    # bf16 MXU-operand path (default; recommended for v6e/v7x)
    out_bf16 = relation_parser_forward(emb, seq_lens, ne_pos, ne_labels, params,
                                       compute_dtype=jnp.bfloat16)
    out_bf16 = jax.block_until_ready(out_bf16)
    assert out_bf16.shape == (B, N, N, R)
    err16 = float(jnp.max(jnp.abs(out_bf16 - ref)))
    assert err16 <= 8e-2 * scale + 8e-2, f"bf16 path max abs err {err16} (scale {scale})"

    # TODO(synk): _assemble_rel_sents_* (vocab string lookup + MuLMSRelationSentence
    # construction) and training/validation CrossEntropy loss are host-side Python glue,
    # not expressed in the kernel; the transformer `self.embed` is treated as an input.
    print("KERNEL_OK")
</pallas_src>

<mosaic_0001>
module attributes {stable_mosaic.version = 11 : i64} {
  func.func @_relation_kernel(%arg0: i32, %arg1: memref<1x16x32xf32, #tpu.memory_space<vmem>>, %arg2: memref<1x8x1xi32, #tpu.memory_space<vmem>>, %arg3: memref<1x8x1xi32, #tpu.memory_space<vmem>>, %arg4: memref<1x8x1xi32, #tpu.memory_space<vmem>>, %arg5: memref<11x64xf32, #tpu.memory_space<vmem>>, %arg6: memref<32x64xf32, #tpu.memory_space<vmem>>, %arg7: memref<32x64xf32, #tpu.memory_space<vmem>>, %arg8: memref<1x64xf32, #tpu.memory_space<vmem>>, %arg9: memref<64x32xf32, #tpu.memory_space<vmem>>, %arg10: memref<1x32xf32, #tpu.memory_space<vmem>>, %arg11: memref<32x128xf32, #tpu.memory_space<vmem>>, %arg12: memref<1x128xf32, #tpu.memory_space<vmem>>, %arg13: memref<32x128xf32, #tpu.memory_space<vmem>>, %arg14: memref<1x128xf32, #tpu.memory_space<vmem>>, %arg15: memref<128x896xf32, #tpu.memory_space<vmem>>, %arg16: memref<1x56x128xf32, #tpu.memory_space<vmem>>) attributes {dimension_semantics = [#tpu.dimension_semantics<parallel>], iteration_bounds = array<i64: 2>, scalar_prefetch = 0 : i64, scratch_operands = 0 : i64, tpu.core_type = #tpu.core_type<tc>, window_params = [{transform_indices = @transform_0, window_bounds = array<i64: 1, 16, 32>}, {transform_indices = @transform_1, window_bounds = array<i64: 1, 8, 1>}, {transform_indices = @transform_2, window_bounds = array<i64: 1, 8, 1>}, {transform_indices = @transform_3, window_bounds = array<i64: 1, 8, 1>}, {pipeline_mode = #tpu.pipeline_mode<synchronous>, transform_indices = @transform_4, window_bounds = array<i64: 11, 64>}, {pipeline_mode = #tpu.pipeline_mode<synchronous>, transform_indices = @transform_5, window_bounds = array<i64: 32, 64>}, {pipeline_mode = #tpu.pipeline_mode<synchronous>, transform_indices = @transform_6, window_bounds = array<i64: 32, 64>}, {pipeline_mode = #tpu.pipeline_mode<synchronous>, transform_indices = @transform_7, window_bounds = array<i64: 1, 64>}, {pipeline_mode = #tpu.pipeline_mode<synchronous>, transform_indices = @transform_8, window_bounds = array<i64: 64, 32>}, {pipeline_mode = #tpu.pipeline_mode<synchronous>, transform_indices = @transform_9, window_bounds = array<i64: 1, 32>}, {pipeline_mode = #tpu.pipeline_mode<synchronous>, transform_indices = @transform_10, window_bounds = array<i64: 32, 128>}, {pipeline_mode = #tpu.pipeline_mode<synchronous>, transform_indices = @transform_11, window_bounds = array<i64: 1, 128>}, {pipeline_mode = #tpu.pipeline_mode<synchronous>, transform_indices = @transform_12, window_bounds = array<i64: 32, 128>}, {pipeline_mode = #tpu.pipeline_mode<synchronous>, transform_indices = @transform_13, window_bounds = array<i64: 1, 128>}, {pipeline_mode = #tpu.pipeline_mode<synchronous>, transform_indices = @transform_14, window_bounds = array<i64: 128, 896>}, {transform_indices = @transform_15, window_bounds = array<i64: 1, 56, 128>}]} {
    %0 = tpu.iota {dimensions = array<i32: 0>} : vector<1x8x1xi32>
    %c0 = arith.constant 0 : index
    %c0_0 = arith.constant 0 : index
    %c0_1 = arith.constant 0 : index
    %1 = vector.load %arg2[%c0, %c0_0, %c0_1] : memref<1x8x1xi32, #tpu.memory_space<vmem>>, vector<1x8x1xi32>
    %c0_i32 = arith.constant 0 : i32
    %2 = vector.broadcast %c0_i32 : i32 to vector<1x8x1xi32>
    %3 = arith.cmpi sge, %1, %2 : vector<1x8x1xi32>
    %c16_i32 = arith.constant 16 : i32
    %4 = vector.broadcast %c16_i32 : i32 to vector<1x8x1xi32>
    %5 = arith.cmpi slt, %1, %4 : vector<1x8x1xi32>
    %6 = arith.andi %3, %5 : vector<1x8x1xi1>
    %c16_i32_2 = arith.constant 16 : i32
    %7 = vector.broadcast %c16_i32_2 : i32 to vector<1x8x1xi32>
    %8 = arith.muli %0, %7 : vector<1x8x1xi32>
    %9 = arith.addi %8, %1 : vector<1x8x1xi32>
    %c-1_i32 = arith.constant -1 : i32
    %10 = vector.broadcast %c-1_i32 : i32 to vector<1x8x1xi32>
    %11 = arith.select %6, %9, %10 : vector<1x8x1xi1>, vector<1x8x1xi32>
    %12 = vector.shape_cast %11 : vector<1x8x1xi32> to vector<8x1xi32>
    %c0_3 = arith.constant 0 : index
    %c0_4 = arith.constant 0 : index
    %c0_5 = arith.constant 0 : index
    %13 = vector.load %arg3[%c0_3, %c0_4, %c0_5] : memref<1x8x1xi32, #tpu.memory_space<vmem>>, vector<1x8x1xi32>
    %c0_i32_6 = arith.constant 0 : i32
    %14 = vector.broadcast %c0_i32_6 : i32 to vector<1x8x1xi32>
    %15 = arith.cmpi sge, %13, %14 : vector<1x8x1xi32>
    %c16_i32_7 = arith.constant 16 : i32
    %16 = vector.broadcast %c16_i32_7 : i32 to vector<1x8x1xi32>
    %17 = arith.cmpi slt, %13, %16 : vector<1x8x1xi32>
    %18 = arith.andi %15, %17 : vector<1x8x1xi1>
    %c16_i32_8 = arith.constant 16 : i32
    %19 = vector.broadcast %c16_i32_8 : i32 to vector<1x8x1xi32>
    %20 = arith.muli %0, %19 : vector<1x8x1xi32>
    %21 = arith.addi %20, %13 : vector<1x8x1xi32>
    %c-1_i32_9 = arith.constant -1 : i32
    %22 = vector.broadcast %c-1_i32_9 : i32 to vector<1x8x1xi32>
    %23 = arith.select %18, %21, %22 : vector<1x8x1xi1>, vector<1x8x1xi32>
    %24 = vector.shape_cast %23 : vector<1x8x1xi32> to vector<8x1xi32>
    %25 = tpu.concatenate %12, %24 in 0 : vector<8x1xi32>, vector<8x1xi32> -> vector<16x1xi32>
    %26 = tpu.iota {dimensions = array<i32: 1>} : vector<16x16xi32>
    %27 = vector.broadcast %25 : vector<16x1xi32> to vector<16x16xi32>
    %28 = arith.cmpi eq, %26, %27 : vector<16x16xi32>
    %29 = arith.extui %28 : vector<16x16xi1> to vector<16x16xi32>
    %30 = arith.sitofp %29 : vector<16x16xi32> to vector<16x16xf32>
    %c0_10 = arith.constant 0 : index
    %c0_11 = arith.constant 0 : index
    %c0_12 = arith.constant 0 : index
    %31 = vector.load %arg1[%c0_10, %c0_11, %c0_12] : memref<1x16x32xf32, #tpu.memory_space<vmem>>, vector<1x16x32xf32>
    %32 = vector.shape_cast %31 : vector<1x16x32xf32> to vector<16x32xf32>
    %cst = arith.constant dense<0.000000e+00> : vector<16x32xf32>
    %33 = tpu.matmul %30, %32, %cst {dimension_numbers = #tpu.dot_dimension_numbers<[1], [0], [0], [1], [0, 0, 1, 1], [], []>} : vector<16x16xf32>, vector<16x32xf32>, vector<16x32xf32> -> vector<16x32xf32>
    %34 = vector.extract_strided_slice %33 {offsets = [0, 0], sizes = [8, 32], strides = [1, 1]} : vector<16x32xf32> to vector<8x32xf32>
    %35 = vector.extract_strided_slice %33 {offsets = [8, 0], sizes = [8, 32], strides = [1, 1]} : vector<16x32xf32> to vector<8x32xf32>
    %36 = tpu.iota {dimensions = array<i32: 1>} : vector<8x11xi32>
    %c0_13 = arith.constant 0 : index
    %c0_14 = arith.constant 0 : index
    %c0_15 = arith.constant 0 : index
    %37 = vector.load %arg4[%c0_13, %c0_14, %c0_15] : memref<1x8x1xi32, #tpu.memory_space<vmem>>, vector<1x8x1xi32>
    %38 = vector.shape_cast %37 : vector<1x8x1xi32> to vector<8x1xi32>
    %39 = vector.broadcast %38 : vector<8x1xi32> to vector<8x11xi32>
    %40 = arith.cmpi eq, %36, %39 : vector<8x11xi32>
    %41 = arith.extui %40 : vector<8x11xi1> to vector<8x11xi32>
    %42 = arith.sitofp %41 : vector<8x11xi32> to vector<8x11xf32>
    %c0_16 = arith.constant 0 : index
    %c0_17 = arith.constant 0 : index
    %43 = vector.load %arg6[%c0_16, %c0_17] : memref<32x64xf32, #tpu.memory_space<vmem>>, vector<32x64xf32>
    %cst_18 = arith.constant dense<0.000000e+00> : vector<8x64xf32>
    %44 = tpu.matmul %34, %43, %cst_18 {dimension_numbers = #tpu.dot_dimension_numbers<[1], [0], [0], [1], [0, 0, 1, 1], [], []>} : vector<8x32xf32>, vector<32x64xf32>, vector<8x64xf32> -> vector<8x64xf32>
    %c0_19 = arith.constant 0 : index
    %c0_20 = arith.constant 0 : index
    %45 = vector.load %arg7[%c0_19, %c0_20] : memref<32x64xf32, #tpu.memory_space<vmem>>, vector<32x64xf32>
    %cst_21 = arith.constant dense<0.000000e+00> : vector<8x64xf32>
    %46 = tpu.matmul %35, %45, %cst_21 {dimension_numbers = #tpu.dot_dimension_numbers<[1], [0], [0], [1], [0, 0, 1, 1], [], []>} : vector<8x32xf32>, vector<32x64xf32>, vector<8x64xf32> -> vector<8x64xf32>
    %47 = arith.addf %44, %46 : vector<8x64xf32>
    %c0_22 = arith.constant 0 : index
    %c0_23 = arith.constant 0 : index
    %48 = vector.load %arg5[%c0_22, %c0_23] : memref<11x64xf32, #tpu.memory_space<vmem>>, vector<11x64xf32>
    %cst_24 = arith.constant dense<0.000000e+00> : vector<8x64xf32>
    %49 = tpu.matmul %42, %48, %cst_24 {dimension_numbers = #tpu.dot_dimension_numbers<[1], [0], [0], [1], [0, 0, 1, 1], [], []>} : vector<8x11xf32>, vector<11x64xf32>, vector<8x64xf32> -> vector<8x64xf32>
    %50 = arith.addf %47, %49 : vector<8x64xf32>
    %c0_25 = arith.constant 0 : index
    %c0_26 = arith.constant 0 : index
    %51 = vector.load %arg8[%c0_25, %c0_26] : memref<1x64xf32, #tpu.memory_space<vmem>>, vector<1x64xf32>
    %52 = vector.broadcast %51 : vector<1x64xf32> to vector<8x64xf32>
    %53 = arith.addf %50, %52 : vector<8x64xf32>
    %cst_27 = arith.constant 0.000000e+00 : f32
    %54 = vector.broadcast %cst_27 : f32 to vector<8x64xf32>
    %55 = arith.maximumf %53, %54 : vector<8x64xf32>
    %c0_28 = arith.constant 0 : index
    %c0_29 = arith.constant 0 : index
    %56 = vector.load %arg9[%c0_28, %c0_29] : memref<64x32xf32, #tpu.memory_space<vmem>>, vector<64x32xf32>
    %cst_30 = arith.constant dense<0.000000e+00> : vector<8x32xf32>
    %57 = tpu.matmul %55, %56, %cst_30 {dimension_numbers = #tpu.dot_dimension_numbers<[1], [0], [0], [1], [0, 0, 1, 1], [], []>} : vector<8x64xf32>, vector<64x32xf32>, vector<8x32xf32> -> vector<8x32xf32>
    %c0_31 = arith.constant 0 : index
    %c0_32 = arith.constant 0 : index
    %58 = vector.load %arg10[%c0_31, %c0_32] : memref<1x32xf32, #tpu.memory_space<vmem>>, vector<1x32xf32>
    %59 = vector.broadcast %58 : vector<1x32xf32> to vector<8x32xf32>
    %60 = arith.addf %57, %59 : vector<8x32xf32>
    %cst_33 = arith.constant 0.000000e+00 : f32
    %61 = vector.broadcast %cst_33 : f32 to vector<8x32xf32>
    %62 = arith.maximumf %60, %61 : vector<8x32xf32>
    %c0_34 = arith.constant 0 : index
    %c0_35 = arith.constant 0 : index
    %63 = vector.load %arg11[%c0_34, %c0_35] : memref<32x128xf32, #tpu.memory_space<vmem>>, vector<32x128xf32>
    %cst_36 = arith.constant dense<0.000000e+00> : vector<8x128xf32>
    %64 = tpu.matmul %62, %63, %cst_36 {dimension_numbers = #tpu.dot_dimension_numbers<[1], [0], [0], [1], [0, 0, 1, 1], [], []>} : vector<8x32xf32>, vector<32x128xf32>, vector<8x128xf32> -> vector<8x128xf32>
    %c0_37 = arith.constant 0 : index
    %c0_38 = arith.constant 0 : index
    %65 = vector.load %arg12[%c0_37, %c0_38] : memref<1x128xf32, #tpu.memory_space<vmem>>, vector<1x128xf32>
    %66 = vector.broadcast %65 : vector<1x128xf32> to vector<8x128xf32>
    %67 = arith.addf %64, %66 : vector<8x128xf32>
    %cst_39 = arith.constant 0.000000e+00 : f32
    %68 = vector.broadcast %cst_39 : f32 to vector<8x128xf32>
    %69 = arith.maximumf %67, %68 : vector<8x128xf32>
    %c0_40 = arith.constant 0 : index
    %c0_41 = arith.constant 0 : index
    %70 = vector.load %arg13[%c0_40, %c0_41] : memref<32x128xf32, #tpu.memory_space<vmem>>, vector<32x128xf32>
    %cst_42 = arith.constant dense<0.000000e+00> : vector<8x128xf32>
    %71 = tpu.matmul %62, %70, %cst_42 {dimension_numbers = #tpu.dot_dimension_numbers<[1], [0], [0], [1], [0, 0, 1, 1], [], []>} : vector<8x32xf32>, vector<32x128xf32>, vector<8x128xf32> -> vector<8x128xf32>
    %c0_43 = arith.constant 0 : index
    %c0_44 = arith.constant 0 : index
    %72 = vector.load %arg14[%c0_43, %c0_44] : memref<1x128xf32, #tpu.memory_space<vmem>>, vector<1x128xf32>
    %73 = vector.broadcast %72 : vector<1x128xf32> to vector<8x128xf32>
    %74 = arith.addf %71, %73 : vector<8x128xf32>
    %cst_45 = arith.constant 0.000000e+00 : f32
    %75 = vector.broadcast %cst_45 : f32 to vector<8x128xf32>
    %76 = arith.maximumf %74, %75 : vector<8x128xf32>
    %c0_46 = arith.constant 0 : index
    %c0_47 = arith.constant 0 : index
    %77 = vector.load %arg15[%c0_46, %c0_47] : memref<128x896xf32, #tpu.memory_space<vmem>>, vector<128x896xf32>
    %cst_48 = arith.constant dense<0.000000e+00> : vector<8x896xf32>
    %78 = tpu.matmul %69, %77, %cst_48 {dimension_numbers = #tpu.dot_dimension_numbers<[1], [0], [0], [1], [0, 0, 1, 1], [], []>} : vector<8x128xf32>, vector<128x896xf32>, vector<8x896xf32> -> vector<8x896xf32>
    %79 = vector.shape_cast %78 : vector<8x896xf32> to vector<1x56x128xf32>
    %80 = vector.shape_cast %76 : vector<8x128xf32> to vector<1x8x128xf32>
    %cst_49 = arith.constant 0.000000e+00 : f32
    %81 = vector.broadcast %cst_49 : f32 to vector<1x120x128xf32>
    %82 = tpu.concatenate %80, %81 in 1 : vector<1x8x128xf32>, vector<1x120x128xf32> -> vector<1x128x128xf32>
    "tpu.trace_start"() <{level = 10 : i32, message = "brq,bjq->brj"}> : () -> ()
    %cst_50 = arith.constant dense<0.000000e+00> : vector<1x56x128xf32>
    %83 = tpu.matmul %79, %82, %cst_50 {dimension_numbers = #tpu.dot_dimension_numbers<[2], [2], [1], [1], [0, 0, 0, 1, 1, 1], [0], [0]>} : vector<1x56x128xf32>, vector<1x128x128xf32>, vector<1x56x128xf32> -> vector<1x56x128xf32>
    "tpu.trace_stop"() : () -> ()
    %c0_51 = arith.constant 0 : index
    %c0_52 = arith.constant 0 : index
    %c0_53 = arith.constant 0 : index
    %84 = vector.load %arg16[%c0_51, %c0_52, %c0_53] : memref<1x56x128xf32, #tpu.memory_space<vmem>>, vector<1x56x128xf32>
    tpu.vector_store %arg16[%c0_51, %c0_52, %c0_53], %83 {strides = array<i32>} : memref<1x56x128xf32, #tpu.memory_space<vmem>>, vector<1x56x128xf32>,
    return
  }
  func.func @transform_0(%arg0: i32) -> (i32, i32, i32) {
    %c0_i32 = arith.constant 0 : i32
    %c0_i32_0 = arith.constant 0 : i32
    %c0_i32_1 = arith.constant 0 : i32
    return %arg0, %c0_i32, %c0_i32_0 : i32, i32, i32
  }
  func.func @transform_1(%arg0: i32) -> (i32, i32, i32) {
    %c0_i32 = arith.constant 0 : i32
    %c0_i32_0 = arith.constant 0 : i32
    %c0_i32_1 = arith.constant 0 : i32
    return %arg0, %c0_i32, %c0_i32_0 : i32, i32, i32
  }
  func.func @transform_2(%arg0: i32) -> (i32, i32, i32) {
    %c0_i32 = arith.constant 0 : i32
    %c0_i32_0 = arith.constant 0 : i32
    %c0_i32_1 = arith.constant 0 : i32
    return %arg0, %c0_i32, %c0_i32_0 : i32, i32, i32
  }
  func.func @transform_3(%arg0: i32) -> (i32, i32, i32) {
    %c0_i32 = arith.constant 0 : i32
    %c0_i32_0 = arith.constant 0 : i32
    %c0_i32_1 = arith.constant 0 : i32
    return %arg0, %c0_i32, %c0_i32_0 : i32, i32, i32
  }
  func.func @transform_4(%arg0: i32) -> (i32, i32) {
    %c0_i32 = arith.constant 0 : i32
    %c0_i32_0 = arith.constant 0 : i32
    %c0_i32_1 = arith.constant 0 : i32
    return %c0_i32, %c0_i32_0 : i32, i32
  }
  func.func @transform_5(%arg0: i32) -> (i32, i32) {
    %c0_i32 = arith.constant 0 : i32
    %c0_i32_0 = arith.constant 0 : i32
    %c0_i32_1 = arith.constant 0 : i32
    return %c0_i32, %c0_i32_0 : i32, i32
  }
  func.func @transform_6(%arg0: i32) -> (i32, i32) {
    %c0_i32 = arith.constant 0 : i32
    %c0_i32_0 = arith.constant 0 : i32
    %c0_i32_1 = arith.constant 0 : i32
    return %c0_i32, %c0_i32_0 : i32, i32
  }
  func.func @transform_7(%arg0: i32) -> (i32, i32) {
    %c0_i32 = arith.constant 0 : i32
    %c0_i32_0 = arith.constant 0 : i32
    %c0_i32_1 = arith.constant 0 : i32
    return %c0_i32, %c0_i32_0 : i32, i32
  }
  func.func @transform_8(%arg0: i32) -> (i32, i32) {
    %c0_i32 = arith.constant 0 : i32
    %c0_i32_0 = arith.constant 0 : i32
    %c0_i32_1 = arith.constant 0 : i32
    return %c0_i32, %c0_i32_0 : i32, i32
  }
  func.func @transform_9(%arg0: i32) -> (i32, i32) {
    %c0_i32 = arith.constant 0 : i32
    %c0_i32_0 = arith.constant 0 : i32
    %c0_i32_1 = arith.constant 0 : i32
    return %c0_i32, %c0_i32_0 : i32, i32
  }
  func.func @transform_10(%arg0: i32) -> (i32, i32) {
    %c0_i32 = arith.constant 0 : i32
    %c0_i32_0 = arith.constant 0 : i32
    %c0_i32_1 = arith.constant 0 : i32
    return %c0_i32, %c0_i32_0 : i32, i32
  }
  func.func @transform_11(%arg0: i32) -> (i32, i32) {
    %c0_i32 = arith.constant 0 : i32
    %c0_i32_0 = arith.constant 0 : i32
    %c0_i32_1 = arith.constant 0 : i32
    return %c0_i32, %c0_i32_0 : i32, i32
  }
  func.func @transform_12(%arg0: i32) -> (i32, i32) {
    %c0_i32 = arith.constant 0 : i32
    %c0_i32_0 = arith.constant 0 : i32
    %c0_i32_1 = arith.constant 0 : i32
    return %c0_i32, %c0_i32_0 : i32, i32
  }
  func.func @transform_13(%arg0: i32) -> (i32, i32) {
    %c0_i32 = arith.constant 0 : i32
    %c0_i32_0 = arith.constant 0 : i32
    %c0_i32_1 = arith.constant 0 : i32
    return %c0_i32, %c0_i32_0 : i32, i32
  }
  func.func @transform_14(%arg0: i32) -> (i32, i32) {
    %c0_i32 = arith.constant 0 : i32
    %c0_i32_0 = arith.constant 0 : i32
    %c0_i32_1 = arith.constant 0 : i32
    return %c0_i32, %c0_i32_0 : i32, i32
  }
  func.func @transform_15(%arg0: i32) -> (i32, i32, i32) {
    %c0_i32 = arith.constant 0 : i32
    %c0_i32_0 = arith.constant 0 : i32
    %c0_i32_1 = arith.constant 0 : i32
    return %arg0, %c0_i32, %c0_i32_0 : i32, i32, i32
  }
}

</mosaic_0001>

<llo_original>
// kernel: tpu_custom_call.1
$region0: #{tpu_custom_call.1}
  #allocation0 [shape = 'u32[]', space=smem, size = 0x4, offset = 0x4, fixed_abs, tag = 'smem constant byte address 0x4 - core index']
  #allocation1 [shape = 'u32[144,128]{1,0:T(1,128)}', space=vmem, size = 0x12000, scoped, tag = 'internal scratch']
  %s0 = inlined_call_operand.vmem [shape: f32[2,16,32], index: 0, kind: input, shape index: {}]
  %s1 = inlined_call_operand.vmem [shape: s32[2,8,1], index: 1, kind: input, shape index: {}]
  %s2 = inlined_call_operand.vmem [shape: s32[2,8,1], index: 2, kind: input, shape index: {}]
  %s3 = inlined_call_operand.vmem [shape: s32[2,8,1], index: 3, kind: input, shape index: {}]
  %s4 = inlined_call_operand.hbm [shape: f32[11,64], index: 4, kind: input, shape index: {}]
  %s5 = inlined_call_operand.vmem [shape: f32[32,64], index: 5, kind: input, shape index: {}]
  %s6 = inlined_call_operand.vmem [shape: f32[32,64], index: 6, kind: input, shape index: {}]
  %s7 = inlined_call_operand.vmem [shape: f32[1,64], index: 7, kind: input, shape index: {}]
  %s8 = inlined_call_operand.vmem [shape: f32[64,32], index: 8, kind: input, shape index: {}]
  %s9 = inlined_call_operand.vmem [shape: f32[1,32], index: 9, kind: input, shape index: {}]
  %s10 = inlined_call_operand.vmem [shape: f32[32,128], index: 10, kind: input, shape index: {}]
  %s11 = inlined_call_operand.vmem [shape: f32[1,128], index: 11, kind: input, shape index: {}]
  %s12 = inlined_call_operand.hbm [shape: f32[32,128], index: 12, kind: input, shape index: {}]
  %s13 = inlined_call_operand.vmem [shape: f32[1,128], index: 13, kind: input, shape index: {}]
  %s14 = inlined_call_operand.hbm [shape: f32[128,896], index: 14, kind: input, shape index: {}]
  %s15 = inlined_call_operand.hbm [shape: f32[2,56,128], index: 15, kind: output, shape index: {}]
  %s16 = sld [smem:[#allocation0]]
  $region105: #{tpu_custom_call.1} parent=0
    _
  %s18 = ssub.s32 1, %s16
  %s19 = scalar_select 0, %s18, %s16
  $region1: #{tpu_custom_call.1} parent=0
    #allocation2 [shape = 'u8[8192]{0}', space=vmem, size = 0x2000, scoped, tag = 'input window, operand 4, single buffered']
    #allocation3 [shape = 's32[2]{0}', space=sflag, size = 0x8, scoped, tag = 'scoped memory for tpu_custom_call.1']
    #allocation4 [shape = 's32[2]{0}', space=sflag, size = 0x8, scoped, tag = 'scoped memory for tpu_custom_call.1']
    #allocation5 [shape = 'u8[16384]{0}', space=vmem, size = 0x4000, scoped, tag = 'input window, operand 12, single buffered']
    #allocation6 [shape = 's32[1]{0}', space=sflag, size = 0x4, scoped, tag = 'scoped memory for tpu_custom_call.1']
    #allocation7 [shape = 'u8[458752]{0}', space=vmem, size = 0x70000, scoped, tag = 'input window, operand 14, single buffered']
    #allocation8 [shape = 'u8[57344]{0}', space=vmem, size = 0xe000, scoped, tag = 'output window, operand 0']
    %20 = vsyncpa [#allocation3], 0
    %21 = vsyncpa [#allocation6], 0
    %22 = vsyncpa [#allocation4], 0
    %s23 = scalar_lea.sflag [#allocation4], 1
    %24 = vsyncpa %s23, 0
    loop: start=0, step=1, limit=4
    $region2: #{tpu_custom_call.1} parent=1 // loop_pre_header
      _
    $region3: #{tpu_custom_call.1} parent=1 // loop_header
      %s26 = sphi 0, %s30
      %p27 = scmp.ge.s32.totalorder %s26, 4
      %s36 = sphi 0, %s38
      %s39 = sphi 0, %s36
      %s40 = sphi 0, %s39
      %s56 = sphi 0, %s40
      %s62 = sphi 0, %s64
      %s65 = sphi 0, %s62
      %s66 = sphi 0, %s65
      %s82 = sphi 0, %s66
      %s88 = sphi 0, %s90
      %s91 = sphi 0, %s88
      %s92 = sphi 0, %s91
      %s108 = sphi 0, %s92
      %s114 = sphi 0, %s116
      %s117 = sphi 0, %s114
      %s118 = sphi 0, %s117
      %s134 = sphi 0, %s118
      %s138 = sphi 0, %s138
      %s140 = sphi 0, %s138
      %s141 = sphi 0, %s140
      %s155 = sphi 0, %s141
      %s159 = sphi 0, %s159
      %s161 = sphi 0, %s159
      %s162 = sphi 0, %s161
      %s176 = sphi 0, %s162
      %s180 = sphi 0, %s180
      %s182 = sphi 0, %s180
      %s183 = sphi 0, %s182
      %s197 = sphi 0, %s183
      %s201 = sphi 0, %s201
      %s203 = sphi 0, %s201
      %s204 = sphi 0, %s203
      %s218 = sphi 0, %s204
      %s222 = sphi 0, %s222
      %s224 = sphi 0, %s222
      %s225 = sphi 0, %s224
      %s239 = sphi 0, %s225
      %s243 = sphi 0, %s243
      %s245 = sphi 0, %s243
      %s246 = sphi 0, %s245
      %s260 = sphi 0, %s246
      %s264 = sphi 0, %s264
      %s266 = sphi 0, %s264
      %s267 = sphi 0, %s266
      %s281 = sphi 0, %s267
      %s285 = sphi 0, %s285
      %s287 = sphi 0, %s285
      %s288 = sphi 0, %s287
      %s302 = sphi 0, %s288
      %s306 = sphi 0, %s306
      %s308 = sphi 0, %s306
      %s309 = sphi 0, %s308
      %s323 = sphi 0, %s309
      %s327 = sphi 0, %s327
      %s329 = sphi 0, %s327
      %s330 = sphi 0, %s329
      %s344 = sphi 0, %s330
      %s348 = sphi 0, %s348
      %s350 = sphi 0, %s348
      %s351 = sphi 0, %s350
      %s365 = sphi 0, %s351
      %s371 = sphi 0, %s373
      %s374 = sphi 0, %s371
      %s375 = sphi 0, %s374
      %s391 = sphi 0, %s375
    $region4: #{tpu_custom_call.1} parent=1 // loop_header_branch
      %29 = sbr.rel (%p27) target = $region8
    $region5: #{tpu_custom_call.1} parent=1 // loop_body
      %s31 = ssub.s32 %s26, 1
      %s32 = ssub.s32 %s26, 2
      %s33 = sadd.s32 %s26, 1
      %s34 = ssub.s32 %s26, %s33
      %p35 = scmp.eq.s32.totalorder %s34, 0
      %s37 = sadd.s32 %s36, 1
      %s38 = scalar_select %p35, %s36, %s37
      %p41 = pneg %p35
      %p42 = scmp.eq.s32.totalorder %s26, 1
      %p43 = por %p41, %p42
      %p44 = scmp.ne.s32.totalorder %s36, %s39
      %p45 = scmp.eq.s32.totalorder %s26, 0
      %p46 = por %p44, %p45
      %p47 = scmp.ne.s32.totalorder %s36, %s39
      %p48 = scmp.eq.s32.totalorder %s31, 1
      %p49 = por %p47, %p48
      %p50 = scmp.ne.s32.totalorder %s39, %s40
      %p51 = scmp.eq.s32.totalorder %s31, 0
      %p52 = por %p50, %p51
      %p53 = scmp.ne.s32.totalorder %s39, %s40
      %p54 = scmp.eq.s32.totalorder %s32, 1
      %p55 = por %p53, %p54
      %p57 = scmp.ne.s32.totalorder %s40, %s56
      %p58 = scmp.eq.s32.totalorder %s32, 0
      %p59 = por %p57, %p58
      %s60 = ssub.s32 %s26, %s33
      %p61 = scmp.eq.s32.totalorder %s60, 0
      %s63 = sadd.s32 %s62, 1
      %s64 = scalar_select %p61, %s62, %s63
      %p67 = pneg %p61
      %p68 = scmp.eq.s32.totalorder %s26, 1
      %p69 = por %p67, %p68
      %p70 = scmp.ne.s32.totalorder %s62, %s65
      %p71 = scmp.eq.s32.totalorder %s26, 0
      %p72 = por %p70, %p71
      %p73 = scmp.ne.s32.totalorder %s62, %s65
      %p74 = scmp.eq.s32.totalorder %s31, 1
      %p75 = por %p73, %p74
      %p76 = scmp.ne.s32.totalorder %s65, %s66
      %p77 = scmp.eq.s32.totalorder %s31, 0
      %p78 = por %p76, %p77
      %p79 = scmp.ne.s32.totalorder %s65, %s66
      %p80 = scmp.eq.s32.totalorder %s32, 1
      %p81 = por %p79, %p80
      %p83 = scmp.ne.s32.totalorder %s66, %s82
      %p84 = scmp.eq.s32.totalorder %s32, 0
      %p85 = por %p83, %p84
      %s86 = ssub.s32 %s26, %s33
      %p87 = scmp.eq.s32.totalorder %s86, 0
      %s89 = sadd.s32 %s88, 1
      %s90 = scalar_select %p87, %s88, %s89
      %p93 = pneg %p87
      %p94 = scmp.eq.s32.totalorder %s26, 1
      %p95 = por %p93, %p94
      %p96 = scmp.ne.s32.totalorder %s88, %s91
      %p97 = scmp.eq.s32.totalorder %s26, 0
      %p98 = por %p96, %p97
      %p99 = scmp.ne.s32.totalorder %s88, %s91
      %p100 = scmp.eq.s32.totalorder %s31, 1
      %p101 = por %p99, %p100
      %p102 = scmp.ne.s32.totalorder %s91, %s92
      %p103 = scmp.eq.s32.totalorder %s31, 0
      %p104 = por %p102, %p103
      %p105 = scmp.ne.s32.totalorder %s91, %s92
      %p106 = scmp.eq.s32.totalorder %s32, 1
      %p107 = por %p105, %p106
      %p109 = scmp.ne.s32.totalorder %s92, %s108
      %p110 = scmp.eq.s32.totalorder %s32, 0
      %p111 = por %p109, %p110
      %s112 = ssub.s32 %s26, %s33
      %p113 = scmp.eq.s32.totalorder %s112, 0
      %s115 = sadd.s32 %s114, 1
      %s116 = scalar_select %p113, %s114, %s115
      %p119 = pneg %p113
      %p120 = scmp.eq.s32.totalorder %s26, 1
      %p121 = por %p119, %p120
      %p122 = scmp.ne.s32.totalorder %s114, %s117
      %p123 = scmp.eq.s32.totalorder %s26, 0
      %p124 = por %p122, %p123
      %p125 = scmp.ne.s32.totalorder %s114, %s117
      %p126 = scmp.eq.s32.totalorder %s31, 1
      %p127 = por %p125, %p126
      %p128 = scmp.ne.s32.totalorder %s117, %s118
      %p129 = scmp.eq.s32.totalorder %s31, 0
      %p130 = por %p128, %p129
      %p131 = scmp.ne.s32.totalorder %s117, %s118
      %p132 = scmp.eq.s32.totalorder %s32, 1
      %p133 = por %p131, %p132
      %p135 = scmp.ne.s32.totalorder %s118, %s134
      %p136 = scmp.eq.s32.totalorder %s32, 0
      %p137 = por %p135, %p136
      %s139 = sadd.s32 %s138, 1
      %p142 = scmp.eq.s32.totalorder %s26, 1
      %p143 = scmp.ne.s32.totalorder %s138, %s140
      %p144 = scmp.eq.s32.totalorder %s26, 0
      %p145 = por %p143, %p144
      %p146 = scmp.ne.s32.totalorder %s138, %s140
      %p147 = scmp.eq.s32.totalorder %s31, 1
      %p148 = por %p146, %p147
      %p149 = scmp.ne.s32.totalorder %s140, %s141
      %p150 = scmp.eq.s32.totalorder %s31, 0
      %p151 = por %p149, %p150
      %p152 = scmp.ne.s32.totalorder %s140, %s141
      %p153 = scmp.eq.s32.totalorder %s32, 1
      %p154 = por %p152, %p153
      %p156 = scmp.ne.s32.totalorder %s141, %s155
      %p157 = scmp.eq.s32.totalorder %s32, 0
      %p158 = por %p156, %p157
      %s160 = sadd.s32 %s159, 1
      %p163 = scmp.eq.s32.totalorder %s26, 1
      %p164 = scmp.ne.s32.totalorder %s159, %s161
      %p165 = scmp.eq.s32.totalorder %s26, 0
      %p166 = por %p164, %p165
      %p167 = scmp.ne.s32.totalorder %s159, %s161
      %p168 = scmp.eq.s32.totalorder %s31, 1
      %p169 = por %p167, %p168
      %p170 = scmp.ne.s32.totalorder %s161, %s162
      %p171 = scmp.eq.s32.totalorder %s31, 0
      %p172 = por %p170, %p171
      %p173 = scmp.ne.s32.totalorder %s161, %s162
      %p174 = scmp.eq.s32.totalorder %s32, 1
      %p175 = por %p173, %p174
      %p177 = scmp.ne.s32.totalorder %s162, %s176
      %p178 = scmp.eq.s32.totalorder %s32, 0
      %p179 = por %p177, %p178
      %s181 = sadd.s32 %s180, 1
      %p184 = scmp.eq.s32.totalorder %s26, 1
      %p185 = scmp.ne.s32.totalorder %s180, %s182
      %p186 = scmp.eq.s32.totalorder %s26, 0
      %p187 = por %p185, %p186
      %p188 = scmp.ne.s32.totalorder %s180, %s182
      %p189 = scmp.eq.s32.totalorder %s31, 1
      %p190 = por %p188, %p189
      %p191 = scmp.ne.s32.totalorder %s182, %s183
      %p192 = scmp.eq.s32.totalorder %s31, 0
      %p193 = por %p191, %p192
      %p194 = scmp.ne.s32.totalorder %s182, %s183
      %p195 = scmp.eq.s32.totalorder %s32, 1
      %p196 = por %p194, %p195
      %p198 = scmp.ne.s32.totalorder %s183, %s197
      %p199 = scmp.eq.s32.totalorder %s32, 0
      %p200 = por %p198, %p199
      %s202 = sadd.s32 %s201, 1
      %p205 = scmp.eq.s32.totalorder %s26, 1
      %p206 = scmp.ne.s32.totalorder %s201, %s203
      %p207 = scmp.eq.s32.totalorder %s26, 0
      %p208 = por %p206, %p207
      %p209 = scmp.ne.s32.totalorder %s201, %s203
      %p210 = scmp.eq.s32.totalorder %s31, 1
      %p211 = por %p209, %p210
      %p212 = scmp.ne.s32.totalorder %s203, %s204
      %p213 = scmp.eq.s32.totalorder %s31, 0
      %p214 = por %p212, %p213
      %p215 = scmp.ne.s32.totalorder %s203, %s204
      %p216 = scmp.eq.s32.totalorder %s32, 1
      %p217 = por %p215, %p216
      %p219 = scmp.ne.s32.totalorder %s204, %s218
      %p220 = scmp.eq.s32.totalorder %s32, 0
      %p221 = por %p219, %p220
      %s223 = sadd.s32 %s222, 1
      %p226 = scmp.eq.s32.totalorder %s26, 1
      %p227 = scmp.ne.s32.totalorder %s222, %s224
      %p228 = scmp.eq.s32.totalorder %s26, 0
      %p229 = por %p227, %p228
      %p230 = scmp.ne.s32.totalorder %s222, %s224
      %p231 = scmp.eq.s32.totalorder %s31, 1
      %p232 = por %p230, %p231
      %p233 = scmp.ne.s32.totalorder %s224, %s225
      %p234 = scmp.eq.s32.totalorder %s31, 0
      %p235 = por %p233, %p234
      %p236 = scmp.ne.s32.totalorder %s224, %s225
      %p237 = scmp.eq.s32.totalorder %s32, 1
      %p238 = por %p236, %p237
      %p240 = scmp.ne.s32.totalorder %s225, %s239
      %p241 = scmp.eq.s32.totalorder %s32, 0
      %p242 = por %p240, %p241
      %s244 = sadd.s32 %s243, 1
      %p247 = scmp.eq.s32.totalorder %s26, 1
      %p248 = scmp.ne.s32.totalorder %s243, %s245
      %p249 = scmp.eq.s32.totalorder %s26, 0
      %p250 = por %p248, %p249
      %p251 = scmp.ne.s32.totalorder %s243, %s245
      %p252 = scmp.eq.s32.totalorder %s31, 1
      %p253 = por %p251, %p252
      %p254 = scmp.ne.s32.totalorder %s245, %s246
      %p255 = scmp.eq.s32.totalorder %s31, 0
      %p256 = por %p254, %p255
      %p257 = scmp.ne.s32.totalorder %s245, %s246
      %p258 = scmp.eq.s32.totalorder %s32, 1
      %p259 = por %p257, %p258
      %p261 = scmp.ne.s32.totalorder %s246, %s260
      %p262 = scmp.eq.s32.totalorder %s32, 0
      %p263 = por %p261, %p262
      %s265 = sadd.s32 %s264, 1
      %p268 = scmp.eq.s32.totalorder %s26, 1
      %p269 = scmp.ne.s32.totalorder %s264, %s266
      %p270 = scmp.eq.s32.totalorder %s26, 0
      %p271 = por %p269, %p270
      %p272 = scmp.ne.s32.totalorder %s264, %s266
      %p273 = scmp.eq.s32.totalorder %s31, 1
      %p274 = por %p272, %p273
      %p275 = scmp.ne.s32.totalorder %s266, %s267
      %p276 = scmp.eq.s32.totalorder %s31, 0
      %p277 = por %p275, %p276
      %p278 = scmp.ne.s32.totalorder %s266, %s267
      %p279 = scmp.eq.s32.totalorder %s32, 1
      %p280 = por %p278, %p279
      %p282 = scmp.ne.s32.totalorder %s267, %s281
      %p283 = scmp.eq.s32.totalorder %s32, 0
      %p284 = por %p282, %p283
      %s286 = sadd.s32 %s285, 1
      %p289 = scmp.eq.s32.totalorder %s26, 1
      %p290 = scmp.ne.s32.totalorder %s285, %s287
      %p291 = scmp.eq.s32.totalorder %s26, 0
      %p292 = por %p290, %p291
      %p293 = scmp.ne.s32.totalorder %s285, %s287
      %p294 = scmp.eq.s32.totalorder %s31, 1
      %p295 = por %p293, %p294
      %p296 = scmp.ne.s32.totalorder %s287, %s288
      %p297 = scmp.eq.s32.totalorder %s31, 0
      %p298 = por %p296, %p297
      %p299 = scmp.ne.s32.totalorder %s287, %s288
      %p300 = scmp.eq.s32.totalorder %s32, 1
      %p301 = por %p299, %p300
      %p303 = scmp.ne.s32.totalorder %s288, %s302
      %p304 = scmp.eq.s32.totalorder %s32, 0
      %p305 = por %p303, %p304
      %s307 = sadd.s32 %s306, 1
      %p310 = scmp.eq.s32.totalorder %s26, 1
      %p311 = scmp.ne.s32.totalorder %s306, %s308
      %p312 = scmp.eq.s32.totalorder %s26, 0
      %p313 = por %p311, %p312
      %p314 = scmp.ne.s32.totalorder %s306, %s308
      %p315 = scmp.eq.s32.totalorder %s31, 1
      %p316 = por %p314, %p315
      %p317 = scmp.ne.s32.totalorder %s308, %s309
      %p318 = scmp.eq.s32.totalorder %s31, 0
      %p319 = por %p317, %p318
      %p320 = scmp.ne.s32.totalorder %s308, %s309
      %p321 = scmp.eq.s32.totalorder %s32, 1
      %p322 = por %p320, %p321
      %p324 = scmp.ne.s32.totalorder %s309, %s323
      %p325 = scmp.eq.s32.totalorder %s32, 0
      %p326 = por %p324, %p325
      %s328 = sadd.s32 %s327, 1
      %p331 = scmp.eq.s32.totalorder %s26, 1
      %p332 = scmp.ne.s32.totalorder %s327, %s329
      %p333 = scmp.eq.s32.totalorder %s26, 0
      %p334 = por %p332, %p333
      %p335 = scmp.ne.s32.totalorder %s327, %s329
      %p336 = scmp.eq.s32.totalorder %s31, 1
      %p337 = por %p335, %p336
      %p338 = scmp.ne.s32.totalorder %s329, %s330
      %p339 = scmp.eq.s32.totalorder %s31, 0
      %p340 = por %p338, %p339
      %p341 = scmp.ne.s32.totalorder %s329, %s330
      %p342 = scmp.eq.s32.totalorder %s32, 1
      %p343 = por %p341, %p342
      %p345 = scmp.ne.s32.totalorder %s330, %s344
      %p346 = scmp.eq.s32.totalorder %s32, 0
      %p347 = por %p345, %p346
      %s349 = sadd.s32 %s348, 1
      %p352 = scmp.eq.s32.totalorder %s26, 1
      %p353 = scmp.ne.s32.totalorder %s348, %s350
      %p354 = scmp.eq.s32.totalorder %s26, 0
      %p355 = por %p353, %p354
      %p356 = scmp.ne.s32.totalorder %s348, %s350
      %p357 = scmp.eq.s32.totalorder %s31, 1
      %p358 = por %p356, %p357
      %p359 = scmp.ne.s32.totalorder %s350, %s351
      %p360 = scmp.eq.s32.totalorder %s31, 0
      %p361 = por %p359, %p360
      %p362 = scmp.ne.s32.totalorder %s350, %s351
      %p363 = scmp.eq.s32.totalorder %s32, 1
      %p364 = por %p362, %p363
      %p366 = scmp.ne.s32.totalorder %s351, %s365
      %p367 = scmp.eq.s32.totalorder %s32, 0
      %p368 = por %p366, %p367
      %s369 = ssub.s32 %s26, %s33
      %p370 = scmp.eq.s32.totalorder %s369, 0
      %s372 = sadd.s32 %s371, 1
      %s373 = scalar_select %p370, %s371, %s372
      %p376 = pneg %p370
      %p377 = scmp.eq.s32.totalorder %s26, 1
      %p378 = por %p376, %p377
      %p379 = scmp.ne.s32.totalorder %s371, %s374
      %p380 = scmp.eq.s32.totalorder %s26, 0
      %p381 = por %p379, %p380
      %p382 = scmp.ne.s32.totalorder %s371, %s374
      %p383 = scmp.eq.s32.totalorder %s31, 1
      %p384 = por %p382, %p383
      %p385 = scmp.ne.s32.totalorder %s374, %s375
      %p386 = scmp.eq.s32.totalorder %s31, 0
      %p387 = por %p385, %p386
      %p388 = scmp.ne.s32.totalorder %s374, %s375
      %p389 = scmp.eq.s32.totalorder %s32, 1
      %p390 = por %p388, %p389
      %p392 = scmp.ne.s32.totalorder %s375, %s391
      %p393 = scmp.eq.s32.totalorder %s32, 0
      %p394 = por %p392, %p393
      %p395 = scmp.le.s32.totalorder 1, %s26
      %p396 = scmp.lt.s32.totalorder %s26, 3
      %p397 = pnand %p395, %p396
      %p398 = pneg %p397
      // Predicated region
      $region9: #{tpu_custom_call.1} parent=5 // pred_check
        _
      $region10: #{tpu_custom_call.1} parent=5 // pred_check_branch
        %400 = sbr.rel (%p397) target = $region12
      $region11: #{tpu_custom_call.1} parent=5 // pred_region
        %s401 = ssub.s32 %s26, 1
        // Predicated region
        $region13: #{tpu_custom_call.1} parent=11 // pred_check
          %p402 = pneg %p151
        $region14: #{tpu_custom_call.1} parent=11 // pred_check_branch
          %404 = sbr.rel (%p402) target = $region16
        $region15: #{tpu_custom_call.1} parent=11 // pred_region
          %s406 = ssub.s32 256, 256
          %407 = vsyncadd [#allocation3], %s406
          %s408 = sshll.u32 [#allocation2], 4
          %s409 = int_to_ptr.vmem [resolvable:$true] %s408
          %414 = dma.hbm_to_vmem [thread:$0]  %s4, 256, %s409, [#allocation3], 128, 128, 8
        $region16: #{tpu_custom_call.1} parent=11 // pred_fallthru
          _
        // Predicated region
        $region17: #{tpu_custom_call.1} parent=11 // pred_check
          %p415 = pneg %p172
        $region18: #{tpu_custom_call.1} parent=11 // pred_check_branch
          %417 = sbr.rel (%p415) target = $region20
        $region19: #{tpu_custom_call.1} parent=11 // pred_region
          _
        $region20: #{tpu_custom_call.1} parent=11 // pred_fallthru
          _
        // Predicated region
        $region21: #{tpu_custom_call.1} parent=11 // pred_check
          %p418 = pneg %p193
        $region22: #{tpu_custom_call.1} parent=11 // pred_check_branch
          %420 = sbr.rel (%p418) target = $region24
        $region23: #{tpu_custom_call.1} parent=11 // pred_region
          _
        $region24: #{tpu_custom_call.1} parent=11 // pred_fallthru
          _
        // Predicated region
        $region25: #{tpu_custom_call.1} parent=11 // pred_check
          %p421 = pneg %p214
        $region26: #{tpu_custom_call.1} parent=11 // pred_check_branch
          %423 = sbr.rel (%p421) target = $region28
        $region27: #{tpu_custom_call.1} parent=11 // pred_region
          _
        $region28: #{tpu_custom_call.1} parent=11 // pred_fallthru
          _
        // Predicated region
        $region29: #{tpu_custom_call.1} parent=11 // pred_check
          %p424 = pneg %p235
        $region30: #{tpu_custom_call.1} parent=11 // pred_check_branch
          %426 = sbr.rel (%p424) target = $region32
        $region31: #{tpu_custom_call.1} parent=11 // pred_region
          _
        $region32: #{tpu_custom_call.1} parent=11 // pred_fallthru
          _
        // Predicated region
        $region33: #{tpu_custom_call.1} parent=11 // pred_check
          %p427 = pneg %p256
        $region34: #{tpu_custom_call.1} parent=11 // pred_check_branch
          %429 = sbr.rel (%p427) target = $region36
        $region35: #{tpu_custom_call.1} parent=11 // pred_region
          _
        $region36: #{tpu_custom_call.1} parent=11 // pred_fallthru
          _
        // Predicated region
        $region37: #{tpu_custom_call.1} parent=11 // pred_check
          %p430 = pneg %p277
        $region38: #{tpu_custom_call.1} parent=11 // pred_check_branch
          %432 = sbr.rel (%p430) target = $region40
        $region39: #{tpu_custom_call.1} parent=11 // pred_region
          _
        $region40: #{tpu_custom_call.1} parent=11 // pred_fallthru
          _
        // Predicated region
        $region41: #{tpu_custom_call.1} parent=11 // pred_check
          %p433 = pneg %p298
        $region42: #{tpu_custom_call.1} parent=11 // pred_check_branch
          %435 = sbr.rel (%p433) target = $region44
        $region43: #{tpu_custom_call.1} parent=11 // pred_region
          _
        $region44: #{tpu_custom_call.1} parent=11 // pred_fallthru
          _
        // Predicated region
        $region45: #{tpu_custom_call.1} parent=11 // pred_check
          %p436 = pneg %p319
        $region46: #{tpu_custom_call.1} parent=11 // pred_check_branch
          %438 = sbr.rel (%p436) target = $region48
        $region47: #{tpu_custom_call.1} parent=11 // pred_region
          %s440 = ssub.s32 512, 512
          %441 = vsyncadd [#allocation6], %s440
          %s442 = sshll.u32 [#allocation5], 4
          %s443 = int_to_ptr.vmem [resolvable:$true] %s442
          %448 = dma.hbm_to_vmem [thread:$0]  %s12, 512, %s443, [#allocation6], 128, 128, 8
        $region48: #{tpu_custom_call.1} parent=11 // pred_fallthru
          _
        // Predicated region
        $region49: #{tpu_custom_call.1} parent=11 // pred_check
          %p449 = pneg %p340
        $region50: #{tpu_custom_call.1} parent=11 // pred_check_branch
          %451 = sbr.rel (%p449) target = $region52
        $region51: #{tpu_custom_call.1} parent=11 // pred_region
          _
        $region52: #{tpu_custom_call.1} parent=11 // pred_fallthru
          _
        // Predicated region
        $region53: #{tpu_custom_call.1} parent=11 // pred_check
          %p452 = pneg %p361
        $region54: #{tpu_custom_call.1} parent=11 // pred_check_branch
          %454 = sbr.rel (%p452) target = $region56
        $region55: #{tpu_custom_call.1} parent=11 // pred_region
          %s456 = ssub.s32 14336, 14336
          %457 = vsyncadd [#allocation6], %s456
          %s458 = sshll.u32 [#allocation7], 4
          %s459 = int_to_ptr.vmem [resolvable:$true] %s458
          %464 = dma.hbm_to_vmem [thread:$0]  %s14, 14336, %s459, [#allocation6], 896, 896, 56
        $region56: #{tpu_custom_call.1} parent=11 // pred_fallthru
          _
      $region12: #{tpu_custom_call.1} parent=5 // pred_fallthru
        _
      %p465 = scmp.lt.s32.totalorder %s26, 2
      // Predicated region
      $region57: #{tpu_custom_call.1} parent=5 // pred_check
        %p466 = pneg %p465
      $region58: #{tpu_custom_call.1} parent=5 // pred_check_branch
        %468 = sbr.rel (%p466) target = $region60
      $region59: #{tpu_custom_call.1} parent=5 // pred_region
        // Predicated region
        $region61: #{tpu_custom_call.1} parent=59 // pred_check
          %p469 = pneg %p46
        $region62: #{tpu_custom_call.1} parent=59 // pred_check_branch
          %471 = sbr.rel (%p469) target = $region64
        $region63: #{tpu_custom_call.1} parent=59 // pred_region
          %p472 = scmp.lt.s32.totalorder %s26, 1
          %s473 = scalar_select %p472, %s26, 1
          %s474 = smul.addr %s473, 2
          %s475 = smul.addr %s474, 8
          %s476 = scalar_lea.vmem %s0, %s475
        $region64: #{tpu_custom_call.1} parent=59 // pred_fallthru
          _
        // Predicated region
        $region65: #{tpu_custom_call.1} parent=59 // pred_check
          %p477 = pneg %p72
        $region66: #{tpu_custom_call.1} parent=59 // pred_check_branch
          %479 = sbr.rel (%p477) target = $region68
        $region67: #{tpu_custom_call.1} parent=59 // pred_region
          %p480 = scmp.lt.s32.totalorder %s26, 1
          %s481 = scalar_select %p480, %s26, 1
          %s482 = smul.addr %s481, 8
          %s483 = scalar_lea.vmem %s1, %s482
        $region68: #{tpu_custom_call.1} parent=59 // pred_fallthru
          _
        // Predicated region
        $region69: #{tpu_custom_call.1} parent=59 // pred_check
          %p484 = pneg %p98
        $region70: #{tpu_custom_call.1} parent=59 // pred_check_branch
          %486 = sbr.rel (%p484) target = $region72
        $region71: #{tpu_custom_call.1} parent=59 // pred_region
          %p487 = scmp.lt.s32.totalorder %s26, 1
          %s488 = scalar_select %p487, %s26, 1
          %s489 = smul.addr %s488, 8
          %s490 = scalar_lea.vmem %s2, %s489
        $region72: #{tpu_custom_call.1} parent=59 // pred_fallthru
          _
        // Predicated region
        $region73: #{tpu_custom_call.1} parent=59 // pred_check
          %p491 = pneg %p124
        $region74: #{tpu_custom_call.1} parent=59 // pred_check_branch
          %493 = sbr.rel (%p491) target = $region76
        $region75: #{tpu_custom_call.1} parent=59 // pred_region
          %p494 = scmp.lt.s32.totalorder %s26, 1
          %s495 = scalar_select %p494, %s26, 1
          %s496 = smul.addr %s495, 8
          %s497 = scalar_lea.vmem %s3, %s496
        $region76: #{tpu_custom_call.1} parent=59 // pred_fallthru
          _
      $region60: #{tpu_custom_call.1} parent=5 // pred_fallthru
        _
      %p498 = scmp.le.s32.totalorder 1, %s26
      %p499 = scmp.lt.s32.totalorder %s26, 3
      %p500 = pnand %p498, %p499
      %p501 = pneg %p500
      // Predicated region
      $region77: #{tpu_custom_call.1} parent=5 // pred_check
        _
      $region78: #{tpu_custom_call.1} parent=5 // pred_check_branch
        %503 = sbr.rel (%p500) target = $region80
      $region79: #{tpu_custom_call.1} parent=5 // pred_region
        %s504 = ssub.s32 %s26, 1
        // Predicated region
        $region81: #{tpu_custom_call.1} parent=79 // pred_check
          %p505 = pneg %p151
        $region82: #{tpu_custom_call.1} parent=79 // pred_check_branch
          %507 = sbr.rel (%p505) target = $region84
        $region83: #{tpu_custom_call.1} parent=79 // pred_region
          %508 = dma.done [#allocation3], 256
        $region84: #{tpu_custom_call.1} parent=79 // pred_fallthru
          _
        // Predicated region
        $region85: #{tpu_custom_call.1} parent=79 // pred_check
          %p509 = pneg %p319
        $region86: #{tpu_custom_call.1} parent=79 // pred_check_branch
          %511 = sbr.rel (%p509) target = $region88
        $region87: #{tpu_custom_call.1} parent=79 // pred_region
          %512 = dma.done [#allocation6], 512
        $region88: #{tpu_custom_call.1} parent=79 // pred_fallthru
          _
        // Predicated region
        $region89: #{tpu_custom_call.1} parent=79 // pred_check
          %p513 = pneg %p361
        $region90: #{tpu_custom_call.1} parent=79 // pred_check_branch
          %515 = sbr.rel (%p513) target = $region92
        $region91: #{tpu_custom_call.1} parent=79 // pred_region
          %516 = dma.done [#allocation6], 14336
        $region92: #{tpu_custom_call.1} parent=79 // pred_fallthru
          _
        %p517 = scmp.lt.s32.totalorder %s31, 1
        %s518 = scalar_select %p517, %s31, 1
        %s519 = smul.addr %s518, 2
        %s520 = smul.addr %s519, 8
        %s521 = scalar_lea.vmem %s0, %s520
        %p522 = pneg %p52
        %p523 = pneg %p49
        %p524 = scmp.lt.s32.totalorder %s31, 1
        %s525 = scalar_select %p524, %s31, 1
        %s526 = smul.addr %s525, 8
        %s527 = scalar_lea.vmem %s1, %s526
        %p528 = pneg %p78
        %p529 = pneg %p75
        %p530 = scmp.lt.s32.totalorder %s31, 1
        %s531 = scalar_select %p530, %s31, 1
        %s532 = smul.addr %s531, 8
        %s533 = scalar_lea.vmem %s2, %s532
        %p534 = pneg %p104
        %p535 = pneg %p101
        %p536 = scmp.lt.s32.totalorder %s31, 1
        %s537 = scalar_select %p536, %s31, 1
        %s538 = smul.addr %s537, 8
        %s539 = scalar_lea.vmem %s3, %s538
        %p540 = pneg %p130
        %p541 = pneg %p127
        %p542 = pneg %p151
        %p543 = pneg %p148
        %p544 = pneg %p172
        %p545 = pneg %p169
        %p546 = pneg %p193
        %p547 = pneg %p190
        %p548 = pneg %p214
        %p549 = pneg %p211
        %p550 = pneg %p235
        %p551 = pneg %p232
        %p552 = pneg %p256
        %p553 = pneg %p253
        %p554 = pneg %p277
        %p555 = pneg %p274
        %p556 = pneg %p298
        %p557 = pneg %p295
        %p558 = pneg %p319
        %p559 = pneg %p316
        %p560 = pneg %p340
        %p561 = pneg %p337
        %p562 = pneg %p361
        %p563 = pneg %p358
        %p564 = pneg %p387
        %p565 = pneg %p384
        %s566 = sand.u32 %s374, 1
        %s567 = scalar_lea.sflag [#allocation4], %s566
        %s568 = sand.u32 %s374, 1
        %s569 = smul.addr %s568, 56
        %s570 = scalar_lea.vmem [#allocation8], %s569
        %p571 = scmp.lt.s32.totalorder %s31, 1
        %s572 = scalar_select %p571, %s31, 1
        %s573 = smul.addr %s572, 2
        %s574 = smul.addr %s573, 8
        %s575 = scalar_lea.vmem %s0, %s574
        %p576 = scmp.lt.s32.totalorder %s31, 1
        %s577 = scalar_select %p576, %s31, 1
        %s578 = smul.addr %s577, 8
        %s579 = scalar_lea.vmem %s1, %s578
        %p580 = scmp.lt.s32.totalorder %s31, 1
        %s581 = scalar_select %p580, %s31, 1
        %s582 = smul.addr %s581, 8
        %s583 = scalar_lea.vmem %s2, %s582
        %p584 = scmp.lt.s32.totalorder %s31, 1
        %s585 = scalar_select %p584, %s31, 1
        %s586 = smul.addr %s585, 8
        %s587 = scalar_lea.vmem %s3, %s586
        %v588 = vld [vmem:[%s579] sm:$0xff]
        %vm589 = vcmp.ge.s32.totalorder %v588, 0
        %vm590 = vcmp.lt.s32.totalorder %v588, 16
        %vm591 = vmand %vm589, %vm590
        %v592 = vsel %vm591, %v588, 4294967295
        %v593 = vld [vmem:[%s583] sm:$0xff]
        %vm594 = vcmp.ge.s32.totalorder %v593, 0
        %vm595 = vcmp.lt.s32.totalorder %v593, 16
        %vm596 = vmand %vm594, %vm595
        %v597 = vsel %vm596, %v593, 4294967295
        %v598 = vlaneseq
        %v599 = vand.u32 %v598, 127
        %600 = vset.pattern.permute.xlu0 0
        %601 = vperm.xlu0 %600, %v592
        %v602 = vpop.permute.xlu0 %601
        %603 = vset.pattern.permute.xlu0 0
        %604 = vperm.xlu0 %603, %v597
        %v605 = vpop.permute.xlu0 %604
        %vm606 = vcmp.eq.s32.totalorder %v599, %v602
        %vm607 = vcmp.eq.s32.totalorder %v599, %v605
        %v608 = vsel %vm606, 1, 0
        %v609 = vsel %vm607, 1, 0
        %v610 = vcvt.s32.f32 %v608
        %v611 = vcvt.s32.f32 %v609
        %v612 = vld [vmem:[%s575] sm:$0xff]
        %v613 = vld [vmem:[%s575 + $0x8] sm:$0xff]
        %vm614 = vcmask 130048
        %v616 = vsel %vm614, %v610, 0
        %v619 = vsel %vm614, %v611, 0
        %621 = vmatprep.subr.mxu0 0.0
        %622 = vmatpush1.msra.mxu0 0.0
        %623 = vmatprep.subr.mxu0 0.0
        %624 = vmatpush1.msra.mxu0 0.0
        %625 = vmatprep.subr.mxu0 0.0
        %626 = vmatpush1.msra.mxu0 0.0
        %627 = vmatprep.subr.mxu0 0.0
        %628 = vmatpush1.msra.mxu0 0.0
        %629 = vmatprep.subr.mxu0 0.0
        %630 = vmatpush1.msra.mxu0 0.0
        %631 = vmatprep.subr.mxu0 0.0
        %632 = vmatpush1.msra.mxu0 0.0
        %633 = vmatprep.subr.mxu0 0.0
        %634 = vmatpush1.msra.mxu0 0.0
        %635 = vmatprep.subr.mxu0 0.0
        %636 = vmatpush1.msra.mxu0 0.0
        %637 = vmatprep.subr.mxu0 0.0
        %638 = vmatpush1.msra.mxu0 0.0
        %639 = vmatprep.subr.mxu0 0.0
        %640 = vmatpush1.msra.mxu0 0.0
        %641 = vmatprep.subr.mxu0 0.0
        %642 = vmatpush1.msra.mxu0 0.0
        %643 = vmatprep.subr.mxu0 0.0
        %644 = vmatpush1.msra.mxu0 0.0
        %645 = vmatprep.subr.mxu0 0.0
        %646 = vmatpush1.msra.mxu0 0.0
        %647 = vmatprep.subr.mxu0 0.0
        %648 = vmatpush1.msra.mxu0 0.0
        %649 = vmatprep.subr.mxu0 0.0
        %650 = vmatpush1.msra.mxu0 %v613
        %651 = vmatprep.subr.mxu0 0.0
        %652 = vmatpush1.msra.mxu0 %v612
        %653 = vmatprep.subr.mxu0 0.0
        %654 = vmatpush2.msra.mxu0 0.0
        %655 = vmatprep.subr.mxu0 0.0
        %656 = vmatpush2.msra.mxu0 0.0
        %657 = vmatprep.subr.mxu0 0.0
        %658 = vmatpush2.msra.mxu0 0.0
        %659 = vmatprep.subr.mxu0 0.0
        %660 = vmatpush2.msra.mxu0 0.0
        %661 = vmatprep.subr.mxu0 0.0
        %662 = vmatpush2.msra.mxu0 0.0
        %663 = vmatprep.subr.mxu0 0.0
        %664 = vmatpush2.msra.mxu0 0.0
        %665 = vmatprep.subr.mxu0 0.0
        %666 = vmatpush2.msra.mxu0 0.0
        %667 = vmatprep.subr.mxu0 0.0
        %668 = vmatpush2.msra.mxu0 0.0
        %669 = vmatprep.subr.mxu0 0.0
        %670 = vmatpush2.msra.mxu0 0.0
        %671 = vmatprep.subr.mxu0 0.0
        %672 = vmatpush2.msra.mxu0 0.0
        %673 = vmatprep.subr.mxu0 0.0
        %674 = vmatpush2.msra.mxu0 0.0
        %675 = vmatprep.subr.mxu0 0.0
        %676 = vmatpush2.msra.mxu0 0.0
        %677 = vmatprep.subr.mxu0 0.0
        %678 = vmatpush2.msra.mxu0 0.0
        %679 = vmatprep.subr.mxu0 0.0
        %680 = vmatpush2.msra.mxu0 0.0
        %681 = vmatprep.subr.mxu0 0.0
        %682 = vmatpush2.msra.mxu0 0.0
        %683 = vmatprep.subr.mxu0 0.0
        %684 = vmatpush2.msra.mxu0 0.0
        %685 = vmatprep.mubr.f32.mxu0 0.0
        %686 = vmatmul.mubr.f32.gmra.mxu0 %v616
        %v687 = vpop.f32.mrf.mxu0
        %v688 = vadd.f32 0.0, %v687
        %v689 = vpop.f32.mrf.mxu0
        %690 = vmatprep.mubr.f32.mxu0 0.0
        %691 = vmatmul.mubr.f32.gmra.mxu0 %v619
        %v692 = vpop.f32.mrf.mxu0
        %v693 = vadd.f32 0.0, %v692
        %v694 = vpop.f32.mrf.mxu0
        %695 = vdwg.mxu0
        %v696 = vld [vmem:[%s587] sm:$0xff]
        %697 = vset.pattern.permute.xlu0 0
        %698 = vperm.xlu0 %697, %v696
        %v699 = vpop.permute.xlu0 %698
        %vm700 = vcmp.eq.s32.totalorder %v599, %v699
        %v701 = vsel %vm700, 1, 0
        %v702 = vcvt.s32.f32 %v701
        %v703 = vld [vmem:[%s5] sm:$0xff]
        %v704 = vld [vmem:[%s5 + $0x8] sm:$0xff]
        %v705 = vld [vmem:[%s5 + $0x10] sm:$0xff]
        %v706 = vld [vmem:[%s5 + $0x18] sm:$0xff]
        %v707 = vld [vmem:[%s6] sm:$0xff]
        %v708 = vld [vmem:[%s6 + $0x8] sm:$0xff]
        %v709 = vld [vmem:[%s6 + $0x10] sm:$0xff]
        %v710 = vld [vmem:[%s6 + $0x18] sm:$0xff]
        %vm711 = vcmask 261120
        %v713 = vsel %vm711, %v693, 0
        %715 = vmatprep.subr.mxu0 0.0
        %716 = vmatpush1.msra.mxu0 0.0
        %717 = vmatprep.subr.mxu0 0.0
        %718 = vmatpush1.msra.mxu0 0.0
        %719 = vmatprep.subr.mxu0 0.0
        %720 = vmatpush1.msra.mxu0 0.0
        %721 = vmatprep.subr.mxu0 0.0
        %722 = vmatpush1.msra.mxu0 0.0
        %723 = vmatprep.subr.mxu0 0.0
        %724 = vmatpush1.msra.mxu0 0.0
        %725 = vmatprep.subr.mxu0 0.0
        %726 = vmatpush1.msra.mxu0 0.0
        %727 = vmatprep.subr.mxu0 0.0
        %728 = vmatpush1.msra.mxu0 0.0
        %729 = vmatprep.subr.mxu0 0.0
        %730 = vmatpush1.msra.mxu0 0.0
        %731 = vmatprep.subr.mxu0 0.0
        %732 = vmatpush1.msra.mxu0 0.0
        %733 = vmatprep.subr.mxu0 0.0
        %734 = vmatpush1.msra.mxu0 0.0
        %735 = vmatprep.subr.mxu0 0.0
        %736 = vmatpush1.msra.mxu0 0.0
        %737 = vmatprep.subr.mxu0 0.0
        %738 = vmatpush1.msra.mxu0 0.0
        %739 = vmatprep.subr.mxu0 0.0
        %740 = vmatpush1.msra.mxu0 %v710
        %741 = vmatprep.subr.mxu0 0.0
        %742 = vmatpush1.msra.mxu0 %v709
        %743 = vmatprep.subr.mxu0 0.0
        %744 = vmatpush1.msra.mxu0 %v708
        %745 = vmatprep.subr.mxu0 0.0
        %746 = vmatpush1.msra.mxu0 %v707
        %747 = vmatprep.subr.mxu0 0.0
        %748 = vmatpush2.msra.mxu0 0.0
        %749 = vmatprep.subr.mxu0 0.0
        %750 = vmatpush2.msra.mxu0 0.0
        %751 = vmatprep.subr.mxu0 0.0
        %752 = vmatpush2.msra.mxu0 0.0
        %753 = vmatprep.subr.mxu0 0.0
        %754 = vmatpush2.msra.mxu0 0.0
        %755 = vmatprep.subr.mxu0 0.0
        %756 = vmatpush2.msra.mxu0 0.0
        %757 = vmatprep.subr.mxu0 0.0
        %758 = vmatpush2.msra.mxu0 0.0
        %759 = vmatprep.subr.mxu0 0.0
        %760 = vmatpush2.msra.mxu0 0.0
        %761 = vmatprep.subr.mxu0 0.0
        %762 = vmatpush2.msra.mxu0 0.0
        %763 = vmatprep.subr.mxu0 0.0
        %764 = vmatpush2.msra.mxu0 0.0
        %765 = vmatprep.subr.mxu0 0.0
        %766 = vmatpush2.msra.mxu0 0.0
        %767 = vmatprep.subr.mxu0 0.0
        %768 = vmatpush2.msra.mxu0 0.0
        %769 = vmatprep.subr.mxu0 0.0
        %770 = vmatpush2.msra.mxu0 0.0
        %771 = vmatprep.subr.mxu0 0.0
        %772 = vmatpush2.msra.mxu0 0.0
        %773 = vmatprep.subr.mxu0 0.0
        %774 = vmatpush2.msra.mxu0 0.0
        %775 = vmatprep.subr.mxu0 0.0
        %776 = vmatpush2.msra.mxu0 0.0
        %777 = vmatprep.subr.mxu0 0.0
        %778 = vmatpush2.msra.mxu0 0.0
        %779 = vmatprep.mubr.f32.mxu0 0.0
        %780 = vmatmul.mubr.f32.gmra.mxu0 %v713
        %v781 = vpop.f32.mrf.mxu0
        %v782 = vadd.f32 0.0, %v781
        %v783 = vpop.f32.mrf.mxu0
        %784 = vdwg.mxu0
        %v786 = vsel %vm711, %v688, 0
        %788 = vmatprep.subr.mxu0 0.0
        %789 = vmatpush1.msra.mxu0 0.0
        %790 = vmatprep.subr.mxu0 0.0
        %791 = vmatpush1.msra.mxu0 0.0
        %792 = vmatprep.subr.mxu0 0.0
        %793 = vmatpush1.msra.mxu0 0.0
        %794 = vmatprep.subr.mxu0 0.0
        %795 = vmatpush1.msra.mxu0 0.0
        %796 = vmatprep.subr.mxu0 0.0
        %797 = vmatpush1.msra.mxu0 0.0
        %798 = vmatprep.subr.mxu0 0.0
        %799 = vmatpush1.msra.mxu0 0.0
        %800 = vmatprep.subr.mxu0 0.0
        %801 = vmatpush1.msra.mxu0 0.0
        %802 = vmatprep.subr.mxu0 0.0
        %803 = vmatpush1.msra.mxu0 0.0
        %804 = vmatprep.subr.mxu0 0.0
        %805 = vmatpush1.msra.mxu0 0.0
        %806 = vmatprep.subr.mxu0 0.0
        %807 = vmatpush1.msra.mxu0 0.0
        %808 = vmatprep.subr.mxu0 0.0
        %809 = vmatpush1.msra.mxu0 0.0
        %810 = vmatprep.subr.mxu0 0.0
        %811 = vmatpush1.msra.mxu0 0.0
        %812 = vmatprep.subr.mxu0 0.0
        %813 = vmatpush1.msra.mxu0 %v706
        %814 = vmatprep.subr.mxu0 0.0
        %815 = vmatpush1.msra.mxu0 %v705
        %816 = vmatprep.subr.mxu0 0.0
        %817 = vmatpush1.msra.mxu0 %v704
        %818 = vmatprep.subr.mxu0 0.0
        %819 = vmatpush1.msra.mxu0 %v703
        %820 = vmatprep.subr.mxu0 0.0
        %821 = vmatpush2.msra.mxu0 0.0
        %822 = vmatprep.subr.mxu0 0.0
        %823 = vmatpush2.msra.mxu0 0.0
        %824 = vmatprep.subr.mxu0 0.0
        %825 = vmatpush2.msra.mxu0 0.0
        %826 = vmatprep.subr.mxu0 0.0
        %827 = vmatpush2.msra.mxu0 0.0
        %828 = vmatprep.subr.mxu0 0.0
        %829 = vmatpush2.msra.mxu0 0.0
        %830 = vmatprep.subr.mxu0 0.0
        %831 = vmatpush2.msra.mxu0 0.0
        %832 = vmatprep.subr.mxu0 0.0
        %833 = vmatpush2.msra.mxu0 0.0
        %834 = vmatprep.subr.mxu0 0.0
        %835 = vmatpush2.msra.mxu0 0.0
        %836 = vmatprep.subr.mxu0 0.0
        %837 = vmatpush2.msra.mxu0 0.0
        %838 = vmatprep.subr.mxu0 0.0
        %839 = vmatpush2.msra.mxu0 0.0
        %840 = vmatprep.subr.mxu0 0.0
        %841 = vmatpush2.msra.mxu0 0.0
        %842 = vmatprep.subr.mxu0 0.0
        %843 = vmatpush2.msra.mxu0 0.0
        %844 = vmatprep.subr.mxu0 0.0
        %845 = vmatpush2.msra.mxu0 0.0
        %846 = vmatprep.subr.mxu0 0.0
        %847 = vmatpush2.msra.mxu0 0.0
        %848 = vmatprep.subr.mxu0 0.0
        %849 = vmatpush2.msra.mxu0 0.0
        %850 = vmatprep.subr.mxu0 0.0
        %851 = vmatpush2.msra.mxu0 0.0
        %852 = vmatprep.mubr.f32.mxu0 0.0
        %853 = vmatmul.mubr.f32.gmra.mxu0 %v786
        %v854 = vpop.f32.mrf.mxu0
        %v855 = vadd.f32 %v782, %v854
        %v856 = vpop.f32.mrf.mxu0
        %857 = vdwg.mxu0
        %v858 = vld [vmem:[#allocation2] sm:$0xff]
        %v859 = vld [vmem:[#allocation2 + $0x8] sm:$0x7]
        %vm860 = vcmask 89088
        %v862 = vsel %vm860, %v702, 0
        %vm864 = vcmask 1042432
        %v866 = vsel %vm864, %v859, 0
        %868 = vmatprep.subr.mxu0 0.0
        %869 = vmatpush1.msra.mxu0 0.0
        %870 = vmatprep.subr.mxu0 0.0
        %871 = vmatpush1.msra.mxu0 0.0
        %872 = vmatprep.subr.mxu0 0.0
        %873 = vmatpush1.msra.mxu0 0.0
        %874 = vmatprep.subr.mxu0 0.0
        %875 = vmatpush1.msra.mxu0 0.0
        %876 = vmatprep.subr.mxu0 0.0
        %877 = vmatpush1.msra.mxu0 0.0
        %878 = vmatprep.subr.mxu0 0.0
        %879 = vmatpush1.msra.mxu0 0.0
        %880 = vmatprep.subr.mxu0 0.0
        %881 = vmatpush1.msra.mxu0 0.0
        %882 = vmatprep.subr.mxu0 0.0
        %883 = vmatpush1.msra.mxu0 0.0
        %884 = vmatprep.subr.mxu0 0.0
        %885 = vmatpush1.msra.mxu0 0.0
        %886 = vmatprep.subr.mxu0 0.0
        %887 = vmatpush1.msra.mxu0 0.0
        %888 = vmatprep.subr.mxu0 0.0
        %889 = vmatpush1.msra.mxu0 0.0
        %890 = vmatprep.subr.mxu0 0.0
        %891 = vmatpush1.msra.mxu0 0.0
        %892 = vmatprep.subr.mxu0 0.0
        %893 = vmatpush1.msra.mxu0 0.0
        %894 = vmatprep.subr.mxu0 0.0
        %895 = vmatpush1.msra.mxu0 0.0
        %896 = vmatprep.subr.mxu0 0.0
        %897 = vmatpush1.msra.mxu0 %v866
        %898 = vmatprep.subr.mxu0 0.0
        %899 = vmatpush1.msra.mxu0 %v858
        %900 = vmatprep.subr.mxu0 0.0
        %901 = vmatpush2.msra.mxu0 0.0
        %902 = vmatprep.subr.mxu0 0.0
        %903 = vmatpush2.msra.mxu0 0.0
        %904 = vmatprep.subr.mxu0 0.0
        %905 = vmatpush2.msra.mxu0 0.0
        %906 = vmatprep.subr.mxu0 0.0
        %907 = vmatpush2.msra.mxu0 0.0
        %908 = vmatprep.subr.mxu0 0.0
        %909 = vmatpush2.msra.mxu0 0.0
        %910 = vmatprep.subr.mxu0 0.0
        %911 = vmatpush2.msra.mxu0 0.0
        %912 = vmatprep.subr.mxu0 0.0
        %913 = vmatpush2.msra.mxu0 0.0
        %914 = vmatprep.subr.mxu0 0.0
        %915 = vmatpush2.msra.mxu0 0.0
        %916 = vmatprep.subr.mxu0 0.0
        %917 = vmatpush2.msra.mxu0 0.0
        %918 = vmatprep.subr.mxu0 0.0
        %919 = vmatpush2.msra.mxu0 0.0
        %920 = vmatprep.subr.mxu0 0.0
        %921 = vmatpush2.msra.mxu0 0.0
        %922 = vmatprep.subr.mxu0 0.0
        %923 = vmatpush2.msra.mxu0 0.0
        %924 = vmatprep.subr.mxu0 0.0
        %925 = vmatpush2.msra.mxu0 0.0
        %926 = vmatprep.subr.mxu0 0.0
        %927 = vmatpush2.msra.mxu0 0.0
        %928 = vmatprep.subr.mxu0 0.0
        %929 = vmatpush2.msra.mxu0 0.0
        %930 = vmatprep.subr.mxu0 0.0
        %931 = vmatpush2.msra.mxu0 0.0
        %932 = vmatprep.mubr.f32.mxu0 0.0
        %933 = vmatmul.mubr.f32.gmra.mxu0 %v862
        %v934 = vpop.f32.mrf.mxu0
        %v935 = vadd.f32 0.0, %v934
        %v936 = vpop.f32.mrf.mxu0
        %937 = vdwg.mxu0
        %v938 = vadd.f32 %v855, %v935
        %v939 = vld [vmem:[%s7] sm:$0x1]
        %v941 = vlaneseq
        %v942 = vshrl.u32 %v941, 7
        %v943 = vsub.s32 0, %v942
        %v944 = vrot.slane %v939, %v943
        %v946 = vadd.f32 %v938, %v944
        %v947 = vmax.f32 %v946, 0.0
        %v948 = vld [vmem:[%s8] sm:$0xff]
        %v949 = vld [vmem:[%s8 + $0x8] sm:$0xff]
        %v950 = vld [vmem:[%s8 + $0x10] sm:$0xff]
        %v951 = vld [vmem:[%s8 + $0x18] sm:$0xff]
        %v952 = vld [vmem:[%s8 + $0x20] sm:$0xff]
        %v953 = vld [vmem:[%s8 + $0x28] sm:$0xff]
        %v954 = vld [vmem:[%s8 + $0x30] sm:$0xff]
        %v955 = vld [vmem:[%s8 + $0x38] sm:$0xff]
        %v956 = vld [vmem:[%s9] sm:$0x1]
        %v958 = vlaneseq
        %v959 = vshrl.u32 %v958, 7
        %v960 = vsub.s32 0, %v959
        %v961 = vrot.slane %v956, %v960
        %vm963 = vcmask 523264
        %v965 = vsel %vm963, %v947, 0
        %967 = vmatprep.subr.mxu0 0.0
        %968 = vmatpush1.msra.mxu0 0.0
        %969 = vmatprep.subr.mxu0 0.0
        %970 = vmatpush1.msra.mxu0 0.0
        %971 = vmatprep.subr.mxu0 0.0
        %972 = vmatpush1.msra.mxu0 0.0
        %973 = vmatprep.subr.mxu0 0.0
        %974 = vmatpush1.msra.mxu0 0.0
        %975 = vmatprep.subr.mxu0 0.0
        %976 = vmatpush1.msra.mxu0 0.0
        %977 = vmatprep.subr.mxu0 0.0
        %978 = vmatpush1.msra.mxu0 0.0
        %979 = vmatprep.subr.mxu0 0.0
        %980 = vmatpush1.msra.mxu0 0.0
        %981 = vmatprep.subr.mxu0 0.0
        %982 = vmatpush1.msra.mxu0 0.0
        %983 = vmatprep.subr.mxu0 0.0
        %984 = vmatpush1.msra.mxu0 %v955
        %985 = vmatprep.subr.mxu0 0.0
        %986 = vmatpush1.msra.mxu0 %v954
        %987 = vmatprep.subr.mxu0 0.0
        %988 = vmatpush1.msra.mxu0 %v953
        %989 = vmatprep.subr.mxu0 0.0
        %990 = vmatpush1.msra.mxu0 %v952
        %991 = vmatprep.subr.mxu0 0.0
        %992 = vmatpush1.msra.mxu0 %v951
        %993 = vmatprep.subr.mxu0 0.0
        %994 = vmatpush1.msra.mxu0 %v950
        %995 = vmatprep.subr.mxu0 0.0
        %996 = vmatpush1.msra.mxu0 %v949
        %997 = vmatprep.subr.mxu0 0.0
        %998 = vmatpush1.msra.mxu0 %v948
        %999 = vmatprep.subr.mxu0 0.0
        %1000 = vmatpush2.msra.mxu0 0.0
        %1001 = vmatprep.subr.mxu0 0.0
        %1002 = vmatpush2.msra.mxu0 0.0
        %1003 = vmatprep.subr.mxu0 0.0
        %1004 = vmatpush2.msra.mxu0 0.0
        %1005 = vmatprep.subr.mxu0 0.0
        %1006 = vmatpush2.msra.mxu0 0.0
        %1007 = vmatprep.subr.mxu0 0.0
        %1008 = vmatpush2.msra.mxu0 0.0
        %1009 = vmatprep.subr.mxu0 0.0
        %1010 = vmatpush2.msra.mxu0 0.0
        %1011 = vmatprep.subr.mxu0 0.0
        %1012 = vmatpush2.msra.mxu0 0.0
        %1013 = vmatprep.subr.mxu0 0.0
        %1014 = vmatpush2.msra.mxu0 0.0
        %1015 = vmatprep.subr.mxu0 0.0
        %1016 = vmatpush2.msra.mxu0 0.0
        %1017 = vmatprep.subr.mxu0 0.0
        %1018 = vmatpush2.msra.mxu0 0.0
        %1019 = vmatprep.subr.mxu0 0.0
        %1020 = vmatpush2.msra.mxu0 0.0
        %1021 = vmatprep.subr.mxu0 0.0
        %1022 = vmatpush2.msra.mxu0 0.0
        %1023 = vmatprep.subr.mxu0 0.0
        %1024 = vmatpush2.msra.mxu0 0.0
        %1025 = vmatprep.subr.mxu0 0.0
        %1026 = vmatpush2.msra.mxu0 0.0
        %1027 = vmatprep.subr.mxu0 0.0
        %1028 = vmatpush2.msra.mxu0 0.0
        %1029 = vmatprep.subr.mxu0 0.0
        %1030 = vmatpush2.msra.mxu0 0.0
        %1031 = vmatprep.mubr.f32.mxu0 0.0
        %1032 = vmatmul.mubr.f32.gmra.mxu0 %v965
        %v1033 = vpop.f32.mrf.mxu0
        %v1034 = vadd.f32 %v961, %v1033
        %v1035 = vpop.f32.mrf.mxu0
        %1036 = vdwg.mxu0
        %v1037 = vmax.f32 %v1034, 0.0
        %v1038 = vld [vmem:[%s10] sm:$0xff]
        %v1039 = vld [vmem:[%s10 + $0x8] sm:$0xff]
        %v1040 = vld [vmem:[%s10 + $0x10] sm:$0xff]
        %v1041 = vld [vmem:[%s10 + $0x18] sm:$0xff]
        %v1042 = vld [vmem:[%s11] sm:$0x1]
        %v1044 = vlaneseq
        %v1045 = vshrl.u32 %v1044, 7
        %v1046 = vsub.s32 0, %v1045
        %v1047 = vrot.slane %v1042, %v1046
        %v1050 = vsel %vm711, %v1037, 0
        %1052 = vmatprep.subr.mxu0 0.0
        %1053 = vmatpush1.msra.mxu0 0.0
        %1054 = vmatprep.subr.mxu0 0.0
        %1055 = vmatpush1.msra.mxu0 0.0
        %1056 = vmatprep.subr.mxu0 0.0
        %1057 = vmatpush1.msra.mxu0 0.0
        %1058 = vmatprep.subr.mxu0 0.0
        %1059 = vmatpush1.msra.mxu0 0.0
        %1060 = vmatprep.subr.mxu0 0.0
        %1061 = vmatpush1.msra.mxu0 0.0
        %1062 = vmatprep.subr.mxu0 0.0
        %1063 = vmatpush1.msra.mxu0 0.0
        %1064 = vmatprep.subr.mxu0 0.0
        %1065 = vmatpush1.msra.mxu0 0.0
        %1066 = vmatprep.subr.mxu0 0.0
        %1067 = vmatpush1.msra.mxu0 0.0
        %1068 = vmatprep.subr.mxu0 0.0
        %1069 = vmatpush1.msra.mxu0 0.0
        %1070 = vmatprep.subr.mxu0 0.0
        %1071 = vmatpush1.msra.mxu0 0.0
        %1072 = vmatprep.subr.mxu0 0.0
        %1073 = vmatpush1.msra.mxu0 0.0
        %1074 = vmatprep.subr.mxu0 0.0
        %1075 = vmatpush1.msra.mxu0 0.0
        %1076 = vmatprep.subr.mxu0 0.0
        %1077 = vmatpush1.msra.mxu0 %v1041
        %1078 = vmatprep.subr.mxu0 0.0
        %1079 = vmatpush1.msra.mxu0 %v1040
        %1080 = vmatprep.subr.mxu0 0.0
        %1081 = vmatpush1.msra.mxu0 %v1039
        %1082 = vmatprep.subr.mxu0 0.0
        %1083 = vmatpush1.msra.mxu0 %v1038
        %1084 = vmatprep.subr.mxu0 0.0
        %1085 = vmatpush2.msra.mxu0 0.0
        %1086 = vmatprep.subr.mxu0 0.0
        %1087 = vmatpush2.msra.mxu0 0.0
        %1088 = vmatprep.subr.mxu0 0.0
        %1089 = vmatpush2.msra.mxu0 0.0
        %1090 = vmatprep.subr.mxu0 0.0
        %1091 = vmatpush2.msra.mxu0 0.0
        %1092 = vmatprep.subr.mxu0 0.0
        %1093 = vmatpush2.msra.mxu0 0.0
        %1094 = vmatprep.subr.mxu0 0.0
        %1095 = vmatpush2.msra.mxu0 0.0
        %1096 = vmatprep.subr.mxu0 0.0
        %1097 = vmatpush2.msra.mxu0 0.0
        %1098 = vmatprep.subr.mxu0 0.0
        %1099 = vmatpush2.msra.mxu0 0.0
        %1100 = vmatprep.subr.mxu0 0.0
        %1101 = vmatpush2.msra.mxu0 0.0
        %1102 = vmatprep.subr.mxu0 0.0
        %1103 = vmatpush2.msra.mxu0 0.0
        %1104 = vmatprep.subr.mxu0 0.0
        %1105 = vmatpush2.msra.mxu0 0.0
        %1106 = vmatprep.subr.mxu0 0.0
        %1107 = vmatpush2.msra.mxu0 0.0
        %1108 = vmatprep.subr.mxu0 0.0
        %1109 = vmatpush2.msra.mxu0 0.0
        %1110 = vmatprep.subr.mxu0 0.0
        %1111 = vmatpush2.msra.mxu0 0.0
        %1112 = vmatprep.subr.mxu0 0.0
        %1113 = vmatpush2.msra.mxu0 0.0
        %1114 = vmatprep.subr.mxu0 0.0
        %1115 = vmatpush2.msra.mxu0 0.0
        %1116 = vmatprep.mubr.f32.mxu0 0.0
        %1117 = vmatmul.mubr.f32.gmra.mxu0 %v1050
        %v1118 = vpop.f32.mrf.mxu0
        %v1119 = vadd.f32 %v1047, %v1118
        %v1120 = vpop.f32.mrf.mxu0
        %1121 = vdwg.mxu0
        %v1122 = vmax.f32 %v1119, 0.0
        %v1123 = vld [vmem:[#allocation5] sm:$0xff]
        %v1124 = vld [vmem:[#allocation5 + $0x8] sm:$0xff]
        %v1125 = vld [vmem:[#allocation5 + $0x10] sm:$0xff]
        %v1126 = vld [vmem:[#allocation5 + $0x18] sm:$0xff]
        %v1127 = vld [vmem:[%s13] sm:$0x1]
        %v1129 = vlaneseq
        %v1130 = vshrl.u32 %v1129, 7
        %v1131 = vsub.s32 0, %v1130
        %v1132 = vrot.slane %v1127, %v1131
        %1134 = vmatprep.subr.mxu0 0.0
        %1135 = vmatpush1.msra.mxu0 0.0
        %1136 = vmatprep.subr.mxu0 0.0
        %1137 = vmatpush1.msra.mxu0 0.0
        %1138 = vmatprep.subr.mxu0 0.0
        %1139 = vmatpush1.msra.mxu0 0.0
        %1140 = vmatprep.subr.mxu0 0.0
        %1141 = vmatpush1.msra.mxu0 0.0
        %1142 = vmatprep.subr.mxu0 0.0
        %1143 = vmatpush1.msra.mxu0 0.0
        %1144 = vmatprep.subr.mxu0 0.0
        %1145 = vmatpush1.msra.mxu0 0.0
        %1146 = vmatprep.subr.mxu0 0.0
        %1147 = vmatpush1.msra.mxu0 0.0
        %1148 = vmatprep.subr.mxu0 0.0
        %1149 = vmatpush1.msra.mxu0 0.0
        %1150 = vmatprep.subr.mxu0 0.0
        %1151 = vmatpush1.msra.mxu0 0.0
        %1152 = vmatprep.subr.mxu0 0.0
        %1153 = vmatpush1.msra.mxu0 0.0
        %1154 = vmatprep.subr.mxu0 0.0
        %1155 = vmatpush1.msra.mxu0 0.0
        %1156 = vmatprep.subr.mxu0 0.0
        %1157 = vmatpush1.msra.mxu0 0.0
        %1158 = vmatprep.subr.mxu0 0.0
        %1159 = vmatpush1.msra.mxu0 %v1126
        %1160 = vmatprep.subr.mxu0 0.0
        %1161 = vmatpush1.msra.mxu0 %v1125
        %1162 = vmatprep.subr.mxu0 0.0
        %1163 = vmatpush1.msra.mxu0 %v1124
        %1164 = vmatprep.subr.mxu0 0.0
        %1165 = vmatpush1.msra.mxu0 %v1123
        %1166 = vmatprep.subr.mxu0 0.0
        %1167 = vmatpush2.msra.mxu0 0.0
        %1168 = vmatprep.subr.mxu0 0.0
        %1169 = vmatpush2.msra.mxu0 0.0
        %1170 = vmatprep.subr.mxu0 0.0
        %1171 = vmatpush2.msra.mxu0 0.0
        %1172 = vmatprep.subr.mxu0 0.0
        %1173 = vmatpush2.msra.mxu0 0.0
        %1174 = vmatprep.subr.mxu0 0.0
        %1175 = vmatpush2.msra.mxu0 0.0
        %1176 = vmatprep.subr.mxu0 0.0
        %1177 = vmatpush2.msra.mxu0 0.0
        %1178 = vmatprep.subr.mxu0 0.0
        %1179 = vmatpush2.msra.mxu0 0.0
        %1180 = vmatprep.subr.mxu0 0.0
        %1181 = vmatpush2.msra.mxu0 0.0
        %1182 = vmatprep.subr.mxu0 0.0
        %1183 = vmatpush2.msra.mxu0 0.0
        %1184 = vmatprep.subr.mxu0 0.0
        %1185 = vmatpush2.msra.mxu0 0.0
        %1186 = vmatprep.subr.mxu0 0.0
        %1187 = vmatpush2.msra.mxu0 0.0
        %1188 = vmatprep.subr.mxu0 0.0
        %1189 = vmatpush2.msra.mxu0 0.0
        %1190 = vmatprep.subr.mxu0 0.0
        %1191 = vmatpush2.msra.mxu0 0.0
        %1192 = vmatprep.subr.mxu0 0.0
        %1193 = vmatpush2.msra.mxu0 0.0
        %1194 = vmatprep.subr.mxu0 0.0
        %1195 = vmatpush2.msra.mxu0 0.0
        %1196 = vmatprep.subr.mxu0 0.0
        %1197 = vmatpush2.msra.mxu0 0.0
        %1198 = vmatprep.mubr.f32.mxu0 0.0
        %1199 = vmatmul.mubr.f32.gmra.mxu0 %v1050
        %v1200 = vpop.f32.mrf.mxu0
        %v1201 = vadd.f32 %v1132, %v1200
        %v1202 = vpop.f32.mrf.mxu0
        %1203 = vdwg.mxu0
        %v1204 = vmax.f32 %v1201, 0.0
        %v1205 = vld [vmem:[#allocation7] sm:$0xff]
        %v1206 = vld [vmem:[#allocation7 + $0x8] sm:$0xff]
        %v1207 = vld [vmem:[#allocation7 + $0x10] sm:$0xff]
        %v1208 = vld [vmem:[#allocation7 + $0x18] sm:$0xff]
        %v1209 = vld [vmem:[#allocation7 + $0x20] sm:$0xff]
        %v1210 = vld [vmem:[#allocation7 + $0x28] sm:$0xff]
        %v1211 = vld [vmem:[#allocation7 + $0x30] sm:$0xff]
        %v1212 = vld [vmem:[#allocation7 + $0x38] sm:$0xff]
        %v1213 = vld [vmem:[#allocation7 + $0x40] sm:$0xff]
        %v1214 = vld [vmem:[#allocation7 + $0x48] sm:$0xff]
        %v1215 = vld [vmem:[#allocation7 + $0x50] sm:$0xff]
        %v1216 = vld [vmem:[#allocation7 + $0x58] sm:$0xff]
        %v1217 = vld [vmem:[#allocation7 + $0x60] sm:$0xff]
        %v1218 = vld [vmem:[#allocation7 + $0x68] sm:$0xff]
        %v1219 = vld [vmem:[#allocation7 + $0x70] sm:$0xff]
        %v1220 = vld [vmem:[#allocation7 + $0x78] sm:$0xff]
        %v1221 = vld [vmem:[#allocation7 + $0x80] sm:$0xff]
        %v1222 = vld [vmem:[#allocation7 + $0x88] sm:$0xff]
        %v1223 = vld [vmem:[#allocation7 + $0x90] sm:$0xff]
        %v1224 = vld [vmem:[#allocation7 + $0x98] sm:$0xff]
        %v1225 = vld [vmem:[#allocation7 + $0xa0] sm:$0xff]
        %v1226 = vld [vmem:[#allocation7 + $0xa8] sm:$0xff]
        %v1227 = vld [vmem:[#allocation7 + $0xb0] sm:$0xff]
        %v1228 = vld [vmem:[#allocation7 + $0xb8] sm:$0xff]
        %v1229 = vld [vmem:[#allocation7 + $0xc0] sm:$0xff]
        %v1230 = vld [vmem:[#allocation7 + $0xc8] sm:$0xff]
        %v1231 = vld [vmem:[#allocation7 + $0xd0] sm:$0xff]
        %v1232 = vld [vmem:[#allocation7 + $0xd8] sm:$0xff]
        %v1233 = vld [vmem:[#allocation7 + $0xe0] sm:$0xff]
        %v1234 = vld [vmem:[#allocation7 + $0xe8] sm:$0xff]
        %v1235 = vld [vmem:[#allocation7 + $0xf0] sm:$0xff]
        %v1236 = vld [vmem:[#allocation7 + $0xf8] sm:$0xff]
        %v1237 = vld [vmem:[#allocation7 + $0x100] sm:$0xff]
        %v1238 = vld [vmem:[#allocation7 + $0x108] sm:$0xff]
        %v1239 = vld [vmem:[#allocation7 + $0x110] sm:$0xff]
        %v1240 = vld [vmem:[#allocation7 + $0x118] sm:$0xff]
        %v1241 = vld [vmem:[#allocation7 + $0x120] sm:$0xff]
        %v1242 = vld [vmem:[#allocation7 + $0x128] sm:$0xff]
        %v1243 = vld [vmem:[#allocation7 + $0x130] sm:$0xff]
        %v1244 = vld [vmem:[#allocation7 + $0x138] sm:$0xff]
        %v1245 = vld [vmem:[#allocation7 + $0x140] sm:$0xff]
        %v1246 = vld [vmem:[#allocation7 + $0x148] sm:$0xff]
        %v1247 = vld [vmem:[#allocation7 + $0x150] sm:$0xff]
        %v1248 = vld [vmem:[#allocation7 + $0x158] sm:$0xff]
        %v1249 = vld [vmem:[#allocation7 + $0x160] sm:$0xff]
        %v1250 = vld [vmem:[#allocation7 + $0x168] sm:$0xff]
        %v1251 = vld [vmem:[#allocation7 + $0x170] sm:$0xff]
        %v1252 = vld [vmem:[#allocation7 + $0x178] sm:$0xff]
        %v1253 = vld [vmem:[#allocation7 + $0x180] sm:$0xff]
        %v1254 = vld [vmem:[#allocation7 + $0x188] sm:$0xff]
        %v1255 = vld [vmem:[#allocation7 + $0x190] sm:$0xff]
        %v1256 = vld [vmem:[#allocation7 + $0x198] sm:$0xff]
        %v1257 = vld [vmem:[#allocation7 + $0x1a0] sm:$0xff]
        %v1258 = vld [vmem:[#allocation7 + $0x1a8] sm:$0xff]
        %v1259 = vld [vmem:[#allocation7 + $0x1b0] sm:$0xff]
        %v1260 = vld [vmem:[#allocation7 + $0x1b8] sm:$0xff]
        %v1261 = vld [vmem:[#allocation7 + $0x1c0] sm:$0xff]
        %v1262 = vld [vmem:[#allocation7 + $0x1c8] sm:$0xff]
        %v1263 = vld [vmem:[#allocation7 + $0x1d0] sm:$0xff]
        %v1264 = vld [vmem:[#allocation7 + $0x1d8] sm:$0xff]
        %v1265 = vld [vmem:[#allocation7 + $0x1e0] sm:$0xff]
        %v1266 = vld [vmem:[#allocation7 + $0x1e8] sm:$0xff]
        %v1267 = vld [vmem:[#allocation7 + $0x1f0] sm:$0xff]
        %v1268 = vld [vmem:[#allocation7 + $0x1f8] sm:$0xff]
        %v1269 = vld [vmem:[#allocation7 + $0x200] sm:$0xff]
        %v1270 = vld [vmem:[#allocation7 + $0x208] sm:$0xff]
        %v1271 = vld [vmem:[#allocation7 + $0x210] sm:$0xff]
        %v1272 = vld [vmem:[#allocation7 + $0x218] sm:$0xff]
        %v1273 = vld [vmem:[#allocation7 + $0x220] sm:$0xff]
        %v1274 = vld [vmem:[#allocation7 + $0x228] sm:$0xff]
        %v1275 = vld [vmem:[#allocation7 + $0x230] sm:$0xff]
        %v1276 = vld [vmem:[#allocation7 + $0x238] sm:$0xff]
        %v1277 = vld [vmem:[#allocation7 + $0x240] sm:$0xff]
        %v1278 = vld [vmem:[#allocation7 + $0x248] sm:$0xff]
        %v1279 = vld [vmem:[#allocation7 + $0x250] sm:$0xff]
        %v1280 = vld [vmem:[#allocation7 + $0x258] sm:$0xff]
        %v1281 = vld [vmem:[#allocation7 + $0x260] sm:$0xff]
        %v1282 = vld [vmem:[#allocation7 + $0x268] sm:$0xff]
        %v1283 = vld [vmem:[#allocation7 + $0x270] sm:$0xff]
        %v1284 = vld [vmem:[#allocation7 + $0x278] sm:$0xff]
        %v1285 = vld [vmem:[#allocation7 + $0x280] sm:$0xff]
        %v1286 = vld [vmem:[#allocation7 + $0x288] sm:$0xff]
        %v1287 = vld [vmem:[#allocation7 + $0x290] sm:$0xff]
        %v1288 = vld [vmem:[#allocation7 + $0x298] sm:$0xff]
        %v1289 = vld [vmem:[#allocation7 + $0x2a0] sm:$0xff]
        %v1290 = vld [vmem:[#allocation7 + $0x2a8] sm:$0xff]
        %v1291 = vld [vmem:[#allocation7 + $0x2b0] sm:$0xff]
        %v1292 = vld [vmem:[#allocation7 + $0x2b8] sm:$0xff]
        %v1293 = vld [vmem:[#allocation7 + $0x2c0] sm:$0xff]
        %v1294 = vld [vmem:[#allocation7 + $0x2c8] sm:$0xff]
        %v1295 = vld [vmem:[#allocation7 + $0x2d0] sm:$0xff]
        %v1296 = vld [vmem:[#allocation7 + $0x2d8] sm:$0xff]
        %v1297 = vld [vmem:[#allocation7 + $0x2e0] sm:$0xff]
        %v1298 = vld [vmem:[#allocation7 + $0x2e8] sm:$0xff]
        %v1299 = vld [vmem:[#allocation7 + $0x2f0] sm:$0xff]
        %v1300 = vld [vmem:[#allocation7 + $0x2f8] sm:$0xff]
        %v1301 = vld [vmem:[#allocation7 + $0x300] sm:$0xff]
        %v1302 = vld [vmem:[#allocation7 + $0x308] sm:$0xff]
        %v1303 = vld [vmem:[#allocation7 + $0x310] sm:$0xff]
        %v1304 = vld [vmem:[#allocation7 + $0x318] sm:$0xff]
        %v1305 = vld [vmem:[#allocation7 + $0x320] sm:$0xff]
        %v1306 = vld [vmem:[#allocation7 + $0x328] sm:$0xff]
        %v1307 = vld [vmem:[#allocation7 + $0x330] sm:$0xff]
        %v1308 = vld [vmem:[#allocation7 + $0x338] sm:$0xff]
        %v1309 = vld [vmem:[#allocation7 + $0x340] sm:$0xff]
        %v1310 = vld [vmem:[#allocation7 + $0x348] sm:$0xff]
        %v1311 = vld [vmem:[#allocation7 + $0x350] sm:$0xff]
        %v1312 = vld [vmem:[#allocation7 + $0x358] sm:$0xff]
        %v1313 = vld [vmem:[#allocation7 + $0x360] sm:$0xff]
        %v1314 = vld [vmem:[#allocation7 + $0x368] sm:$0xff]
        %v1315 = vld [vmem:[#allocation7 + $0x370] sm:$0xff]
        %v1316 = vld [vmem:[#allocation7 + $0x378] sm:$0xff]
        %1317 = vmatprep.subr.mxu0 %v1311
        %1318 = vmatpush1.msra.mxu0 %v1310
        %1319 = vmatprep.subr.mxu0 %v1304
        %1320 = vmatpush1.msra.mxu0 %v1303
        %1321 = vmatprep.subr.mxu0 %v1297
        %1322 = vmatpush1.msra.mxu0 %v1296
        %1323 = vmatprep.subr.mxu0 %v1290
        %1324 = vmatpush1.msra.mxu0 %v1289
        %1325 = vmatprep.subr.mxu0 %v1283
        %1326 = vmatpush1.msra.mxu0 %v1282
        %1327 = vmatprep.subr.mxu0 %v1276
        %1328 = vmatpush1.msra.mxu0 %v1275
        %1329 = vmatprep.subr.mxu0 %v1269
        %1330 = vmatpush1.msra.mxu0 %v1268
        %1331 = vmatprep.subr.mxu0 %v1262
        %1332 = vmatpush1.msra.mxu0 %v1261
        %1333 = vmatprep.subr.mxu0 %v1255
        %1334 = vmatpush1.msra.mxu0 %v1254
        %1335 = vmatprep.subr.mxu0 %v1248
        %1336 = vmatpush1.msra.mxu0 %v1247
        %1337 = vmatprep.subr.mxu0 %v1241
        %1338 = vmatpush1.msra.mxu0 %v1240
        %1339 = vmatprep.subr.mxu0 %v1234
        %1340 = vmatpush1.msra.mxu0 %v1233
        %1341 = vmatprep.subr.mxu0 %v1227
        %1342 = vmatpush1.msra.mxu0 %v1226
        %1343 = vmatprep.subr.mxu0 %v1220
        %1344 = vmatpush1.msra.mxu0 %v1219
        %1345 = vmatprep.subr.mxu0 %v1213
        %1346 = vmatpush1.msra.mxu0 %v1212
        %1347 = vmatprep.subr.mxu0 %v1206
        %1348 = vmatpush1.msra.mxu0 %v1205
        %1349 = vmatprep.subr.mxu0 0.0
        %1350 = vmatpush2.msra.mxu0 0.0
        %1351 = vmatprep.subr.mxu0 0.0
        %1352 = vmatpush2.msra.mxu0 0.0
        %1353 = vmatprep.subr.mxu0 0.0
        %1354 = vmatpush2.msra.mxu0 0.0
        %1355 = vmatprep.subr.mxu0 0.0
        %1356 = vmatpush2.msra.mxu0 0.0
        %1357 = vmatprep.subr.mxu0 0.0
        %1358 = vmatpush2.msra.mxu0 0.0
        %1359 = vmatprep.subr.mxu0 0.0
        %1360 = vmatpush2.msra.mxu0 0.0
        %1361 = vmatprep.subr.mxu0 0.0
        %1362 = vmatpush2.msra.mxu0 0.0
        %1363 = vmatprep.subr.mxu0 0.0
        %1364 = vmatpush2.msra.mxu0 0.0
        %1365 = vmatprep.subr.mxu0 0.0
        %1366 = vmatpush2.msra.mxu0 0.0
        %1367 = vmatprep.subr.mxu0 0.0
        %1368 = vmatpush2.msra.mxu0 0.0
        %1369 = vmatprep.subr.mxu0 0.0
        %1370 = vmatpush2.msra.mxu0 0.0
        %1371 = vmatprep.subr.mxu0 0.0
        %1372 = vmatpush2.msra.mxu0 0.0
        %1373 = vmatprep.subr.mxu0 0.0
        %1374 = vmatpush2.msra.mxu0 0.0
        %1375 = vmatprep.subr.mxu0 0.0
        %1376 = vmatpush2.msra.mxu0 0.0
        %1377 = vmatprep.subr.mxu0 0.0
        %1378 = vmatpush2.msra.mxu0 0.0
        %1379 = vmatprep.subr.mxu0 0.0
        %1380 = vmatpush2.msra.mxu0 0.0
        %1381 = vmatprep.mubr.f32.mxu0 0.0
        %1382 = vmatmul.mubr.f32.gmra.mxu0 %v1122
        %v1383 = vpop.f32.mrf.mxu0
        %v1384 = vadd.f32 0.0, %v1383
        %v1385 = vpop.f32.mrf.mxu0
        %v1386 = vadd.f32 0.0, %v1385
        %1387 = vdwg.mxu0
        %1388 = vmatprep.subr.mxu0 %v1313
        %1389 = vmatpush1.msra.mxu0 %v1312
        %1390 = vmatprep.subr.mxu0 %v1306
        %1391 = vmatpush1.msra.mxu0 %v1305
        %1392 = vmatprep.subr.mxu0 %v1299
        %1393 = vmatpush1.msra.mxu0 %v1298
        %1394 = vmatprep.subr.mxu0 %v1292
        %1395 = vmatpush1.msra.mxu0 %v1291
        %1396 = vmatprep.subr.mxu0 %v1285
        %1397 = vmatpush1.msra.mxu0 %v1284
        %1398 = vmatprep.subr.mxu0 %v1278
        %1399 = vmatpush1.msra.mxu0 %v1277
        %1400 = vmatprep.subr.mxu0 %v1271
        %1401 = vmatpush1.msra.mxu0 %v1270
        %1402 = vmatprep.subr.mxu0 %v1264
        %1403 = vmatpush1.msra.mxu0 %v1263
        %1404 = vmatprep.subr.mxu0 %v1257
        %1405 = vmatpush1.msra.mxu0 %v1256
        %1406 = vmatprep.subr.mxu0 %v1250
        %1407 = vmatpush1.msra.mxu0 %v1249
        %1408 = vmatprep.subr.mxu0 %v1243
        %1409 = vmatpush1.msra.mxu0 %v1242
        %1410 = vmatprep.subr.mxu0 %v1236
        %1411 = vmatpush1.msra.mxu0 %v1235
        %1412 = vmatprep.subr.mxu0 %v1229
        %1413 = vmatpush1.msra.mxu0 %v1228
        %1414 = vmatprep.subr.mxu0 %v1222
        %1415 = vmatpush1.msra.mxu0 %v1221
        %1416 = vmatprep.subr.mxu0 %v1215
        %1417 = vmatpush1.msra.mxu0 %v1214
        %1418 = vmatprep.subr.mxu0 %v1208
        %1419 = vmatpush1.msra.mxu0 %v1207
        %1420 = vmatprep.subr.mxu0 0.0
        %1421 = vmatpush2.msra.mxu0 0.0
        %1422 = vmatprep.subr.mxu0 0.0
        %1423 = vmatpush2.msra.mxu0 0.0
        %1424 = vmatprep.subr.mxu0 0.0
        %1425 = vmatpush2.msra.mxu0 0.0
        %1426 = vmatprep.subr.mxu0 0.0
        %1427 = vmatpush2.msra.mxu0 0.0
        %1428 = vmatprep.subr.mxu0 0.0
        %1429 = vmatpush2.msra.mxu0 0.0
        %1430 = vmatprep.subr.mxu0 0.0
        %1431 = vmatpush2.msra.mxu0 0.0
        %1432 = vmatprep.subr.mxu0 0.0
        %1433 = vmatpush2.msra.mxu0 0.0
        %1434 = vmatprep.subr.mxu0 0.0
        %1435 = vmatpush2.msra.mxu0 0.0
        %1436 = vmatprep.subr.mxu0 0.0
        %1437 = vmatpush2.msra.mxu0 0.0
        %1438 = vmatprep.subr.mxu0 0.0
        %1439 = vmatpush2.msra.mxu0 0.0
        %1440 = vmatprep.subr.mxu0 0.0
        %1441 = vmatpush2.msra.mxu0 0.0
        %1442 = vmatprep.subr.mxu0 0.0
        %1443 = vmatpush2.msra.mxu0 0.0
        %1444 = vmatprep.subr.mxu0 0.0
        %1445 = vmatpush2.msra.mxu0 0.0
        %1446 = vmatprep.subr.mxu0 0.0
        %1447 = vmatpush2.msra.mxu0 0.0
        %1448 = vmatprep.subr.mxu0 0.0
        %1449 = vmatpush2.msra.mxu0 0.0
        %1450 = vmatprep.subr.mxu0 0.0
        %1451 = vmatpush2.msra.mxu0 0.0
        %1452 = vmatprep.mubr.f32.mxu0 0.0
        %1453 = vmatmul.mubr.f32.gmra.mxu0 %v1122
        %v1454 = vpop.f32.mrf.mxu0
        %v1455 = vadd.f32 0.0, %v1454
        %v1456 = vpop.f32.mrf.mxu0
        %v1457 = vadd.f32 0.0, %v1456
        %1458 = vdwg.mxu0
        %1459 = vmatprep.subr.mxu0 %v1315
        %1460 = vmatpush1.msra.mxu0 %v1314
        %1461 = vmatprep.subr.mxu0 %v1308
        %1462 = vmatpush1.msra.mxu0 %v1307
        %1463 = vmatprep.subr.mxu0 %v1301
        %1464 = vmatpush1.msra.mxu0 %v1300
        %1465 = vmatprep.subr.mxu0 %v1294
        %1466 = vmatpush1.msra.mxu0 %v1293
        %1467 = vmatprep.subr.mxu0 %v1287
        %1468 = vmatpush1.msra.mxu0 %v1286
        %1469 = vmatprep.subr.mxu0 %v1280
        %1470 = vmatpush1.msra.mxu0 %v1279
        %1471 = vmatprep.subr.mxu0 %v1273
        %1472 = vmatpush1.msra.mxu0 %v1272
        %1473 = vmatprep.subr.mxu0 %v1266
        %1474 = vmatpush1.msra.mxu0 %v1265
        %1475 = vmatprep.subr.mxu0 %v1259
        %1476 = vmatpush1.msra.mxu0 %v1258
        %1477 = vmatprep.subr.mxu0 %v1252
        %1478 = vmatpush1.msra.mxu0 %v1251
        %1479 = vmatprep.subr.mxu0 %v1245
        %1480 = vmatpush1.msra.mxu0 %v1244
        %1481 = vmatprep.subr.mxu0 %v1238
        %1482 = vmatpush1.msra.mxu0 %v1237
        %1483 = vmatprep.subr.mxu0 %v1231
        %1484 = vmatpush1.msra.mxu0 %v1230
        %1485 = vmatprep.subr.mxu0 %v1224
        %1486 = vmatpush1.msra.mxu0 %v1223
        %1487 = vmatprep.subr.mxu0 %v1217
        %1488 = vmatpush1.msra.mxu0 %v1216
        %1489 = vmatprep.subr.mxu0 %v1210
        %1490 = vmatpush1.msra.mxu0 %v1209
        %1491 = vmatprep.subr.mxu0 0.0
        %1492 = vmatpush2.msra.mxu0 0.0
        %1493 = vmatprep.subr.mxu0 0.0
        %1494 = vmatpush2.msra.mxu0 0.0
        %1495 = vmatprep.subr.mxu0 0.0
        %1496 = vmatpush2.msra.mxu0 0.0
        %1497 = vmatprep.subr.mxu0 0.0
        %1498 = vmatpush2.msra.mxu0 0.0
        %1499 = vmatprep.subr.mxu0 0.0
        %1500 = vmatpush2.msra.mxu0 0.0
        %1501 = vmatprep.subr.mxu0 0.0
        %1502 = vmatpush2.msra.mxu0 0.0
        %1503 = vmatprep.subr.mxu0 0.0
        %1504 = vmatpush2.msra.mxu0 0.0
        %1505 = vmatprep.subr.mxu0 0.0
        %1506 = vmatpush2.msra.mxu0 0.0
        %1507 = vmatprep.subr.mxu0 0.0
        %1508 = vmatpush2.msra.mxu0 0.0
        %1509 = vmatprep.subr.mxu0 0.0
        %1510 = vmatpush2.msra.mxu0 0.0
        %1511 = vmatprep.subr.mxu0 0.0
        %1512 = vmatpush2.msra.mxu0 0.0
        %1513 = vmatprep.subr.mxu0 0.0
        %1514 = vmatpush2.msra.mxu0 0.0
        %1515 = vmatprep.subr.mxu0 0.0
        %1516 = vmatpush2.msra.mxu0 0.0
        %1517 = vmatprep.subr.mxu0 0.0
        %1518 = vmatpush2.msra.mxu0 0.0
        %1519 = vmatprep.subr.mxu0 0.0
        %1520 = vmatpush2.msra.mxu0 0.0
        %1521 = vmatprep.subr.mxu0 0.0
        %1522 = vmatpush2.msra.mxu0 0.0
        %1523 = vmatprep.mubr.f32.mxu0 0.0
        %1524 = vmatmul.mubr.f32.gmra.mxu0 %v1122
        %v1525 = vpop.f32.mrf.mxu0
        %v1526 = vadd.f32 0.0, %v1525
        %v1527 = vpop.f32.mrf.mxu0
        %v1528 = vadd.f32 0.0, %v1527
        %1529 = vdwg.mxu0
        %1530 = vmatprep.subr.mxu0 0.0
        %1531 = vmatpush1.msra.mxu0 %v1316
        %1532 = vmatprep.subr.mxu0 0.0
        %1533 = vmatpush1.msra.mxu0 %v1309
        %1534 = vmatprep.subr.mxu0 0.0
        %1535 = vmatpush1.msra.mxu0 %v1302
        %1536 = vmatprep.subr.mxu0 0.0
        %1537 = vmatpush1.msra.mxu0 %v1295
        %1538 = vmatprep.subr.mxu0 0.0
        %1539 = vmatpush1.msra.mxu0 %v1288
        %1540 = vmatprep.subr.mxu0 0.0
        %1541 = vmatpush1.msra.mxu0 %v1281
        %1542 = vmatprep.subr.mxu0 0.0
        %1543 = vmatpush1.msra.mxu0 %v1274
        %1544 = vmatprep.subr.mxu0 0.0
        %1545 = vmatpush1.msra.mxu0 %v1267
        %1546 = vmatprep.subr.mxu0 0.0
        %1547 = vmatpush1.msra.mxu0 %v1260
        %1548 = vmatprep.subr.mxu0 0.0
        %1549 = vmatpush1.msra.mxu0 %v1253
        %1550 = vmatprep.subr.mxu0 0.0
        %1551 = vmatpush1.msra.mxu0 %v1246
        %1552 = vmatprep.subr.mxu0 0.0
        %1553 = vmatpush1.msra.mxu0 %v1239
        %1554 = vmatprep.subr.mxu0 0.0
        %1555 = vmatpush1.msra.mxu0 %v1232
        %1556 = vmatprep.subr.mxu0 0.0
        %1557 = vmatpush1.msra.mxu0 %v1225
        %1558 = vmatprep.subr.mxu0 0.0
        %1559 = vmatpush1.msra.mxu0 %v1218
        %1560 = vmatprep.subr.mxu0 0.0
        %1561 = vmatpush1.msra.mxu0 %v1211
        %1562 = vmatprep.subr.mxu0 0.0
        %1563 = vmatpush2.msra.mxu0 0.0
        %1564 = vmatprep.subr.mxu0 0.0
        %1565 = vmatpush2.msra.mxu0 0.0
        %1566 = vmatprep.subr.mxu0 0.0
        %1567 = vmatpush2.msra.mxu0 0.0
        %1568 = vmatprep.subr.mxu0 0.0
        %1569 = vmatpush2.msra.mxu0 0.0
        %1570 = vmatprep.subr.mxu0 0.0
        %1571 = vmatpush2.msra.mxu0 0.0
        %1572 = vmatprep.subr.mxu0 0.0
        %1573 = vmatpush2.msra.mxu0 0.0
        %1574 = vmatprep.subr.mxu0 0.0
        %1575 = vmatpush2.msra.mxu0 0.0
        %1576 = vmatprep.subr.mxu0 0.0
        %1577 = vmatpush2.msra.mxu0 0.0
        %1578 = vmatprep.subr.mxu0 0.0
        %1579 = vmatpush2.msra.mxu0 0.0
        %1580 = vmatprep.subr.mxu0 0.0
        %1581 = vmatpush2.msra.mxu0 0.0
        %1582 = vmatprep.subr.mxu0 0.0
        %1583 = vmatpush2.msra.mxu0 0.0
        %1584 = vmatprep.subr.mxu0 0.0
        %1585 = vmatpush2.msra.mxu0 0.0
        %1586 = vmatprep.subr.mxu0 0.0
        %1587 = vmatpush2.msra.mxu0 0.0
        %1588 = vmatprep.subr.mxu0 0.0
        %1589 = vmatpush2.msra.mxu0 0.0
        %1590 = vmatprep.subr.mxu0 0.0
        %1591 = vmatpush2.msra.mxu0 0.0
        %1592 = vmatprep.subr.mxu0 0.0
        %1593 = vmatpush2.msra.mxu0 0.0
        %1594 = vmatprep.mubr.f32.mxu0 0.0
        %1595 = vmatmul.mubr.f32.gmra.mxu0 %v1122
        %v1596 = vpop.f32.mrf.mxu0
        %v1597 = vadd.f32 0.0, %v1596
        %v1598 = vpop.f32.mrf.mxu0
        %1599 = vdwg.mxu0
        %vm1600 = vcmask 1040384
        %v1601 = vsel %vm1600, %v1384, 0.0
        %v1602 = vrot.slane %v1386, 7
        %vm1603 = vcmask 1041409
        %v1604 = vsel %vm1603, %v1602, %v1601
        %v1605 = vrot.slane %v1455, 6
        %vm1606 = vcmask 1042434
        %v1607 = vsel %vm1606, %v1605, %v1604
        %v1608 = vrot.slane %v1457, 5
        %vm1609 = vcmask 1043459
        %v1610 = vsel %vm1609, %v1608, %v1607
        %v1611 = vrot.slane %v1526, 4
        %vm1612 = vcmask 1044484
        %v1613 = vsel %vm1612, %v1611, %v1610
        %v1614 = vrot.slane %v1528, 3
        %vm1615 = vcmask 1045509
        %v1616 = vsel %vm1615, %v1614, %v1613
        %v1617 = vrot.slane %v1597, 2
        %vm1618 = vcmask 1046534
        %v1619 = vsel %vm1618, %v1617, %v1616
        %v1620 = vrot.slane %v1384, 2
        %vm1621 = vcmask 1047559
        %v1622 = vsel %vm1621, %v1620, %v1619
        %v1623 = vrot.slane %v1386, 1
        %v1624 = vsel %vm1600, %v1623, 0.0
        %v1625 = vsel %vm1603, %v1455, %v1624
        %v1626 = vrot.slane %v1457, 7
        %v1627 = vsel %vm1606, %v1626, %v1625
        %v1628 = vrot.slane %v1526, 6
        %v1629 = vsel %vm1609, %v1628, %v1627
        %v1630 = vrot.slane %v1528, 5
        %v1631 = vsel %vm1612, %v1630, %v1629
        %v1632 = vrot.slane %v1597, 4
        %v1633 = vsel %vm1615, %v1632, %v1631
        %v1634 = vrot.slane %v1384, 4
        %v1635 = vsel %vm1618, %v1634, %v1633
        %v1636 = vrot.slane %v1386, 3
        %v1637 = vsel %vm1621, %v1636, %v1635
        %v1638 = vrot.slane %v1455, 2
        %v1639 = vsel %vm1600, %v1638, 0.0
        %v1640 = vrot.slane %v1457, 1
        %v1641 = vsel %vm1603, %v1640, %v1639
        %v1642 = vsel %vm1606, %v1526, %v1641
        %v1643 = vrot.slane %v1528, 7
        %v1644 = vsel %vm1609, %v1643, %v1642
        %v1645 = vrot.slane %v1597, 6
        %v1646 = vsel %vm1612, %v1645, %v1644
        %v1647 = vrot.slane %v1384, 6
        %v1648 = vsel %vm1615, %v1647, %v1646
        %v1649 = vrot.slane %v1386, 5
        %v1650 = vsel %vm1618, %v1649, %v1648
        %v1651 = vrot.slane %v1455, 4
        %v1652 = vsel %vm1621, %v1651, %v1650
        %v1653 = vrot.slane %v1457, 3
        %v1654 = vsel %vm1600, %v1653, 0.0
        %v1655 = vrot.slane %v1526, 2
        %v1656 = vsel %vm1603, %v1655, %v1654
        %v1657 = vrot.slane %v1528, 1
        %v1658 = vsel %vm1606, %v1657, %v1656
        %v1659 = vsel %vm1609, %v1597, %v1658
        %v1660 = vsel %vm1612, %v1384, %v1659
        %v1661 = vsel %vm1615, %v1602, %v1660
        %v1662 = vsel %vm1618, %v1605, %v1661
        %v1663 = vsel %vm1621, %v1608, %v1662
        %v1664 = vsel %vm1600, %v1611, 0.0
        %v1665 = vsel %vm1603, %v1614, %v1664
        %v1666 = vsel %vm1606, %v1617, %v1665
        %v1667 = vsel %vm1609, %v1620, %v1666
        %v1668 = vsel %vm1612, %v1623, %v1667
        %v1669 = vsel %vm1615, %v1455, %v1668
        %v1670 = vsel %vm1618, %v1626, %v1669
        %v1671 = vsel %vm1621, %v1628, %v1670
        %v1672 = vsel %vm1600, %v1630, 0.0
        %v1673 = vsel %vm1603, %v1632, %v1672
        %v1674 = vsel %vm1606, %v1634, %v1673
        %v1675 = vsel %vm1609, %v1636, %v1674
        %v1676 = vsel %vm1612, %v1638, %v1675
        %v1677 = vsel %vm1615, %v1640, %v1676
        %v1678 = vsel %vm1618, %v1526, %v1677
        %v1679 = vsel %vm1621, %v1643, %v1678
        %v1680 = vsel %vm1600, %v1645, 0.0
        %v1681 = vsel %vm1603, %v1647, %v1680
        %v1682 = vsel %vm1606, %v1649, %v1681
        %v1683 = vsel %vm1609, %v1651, %v1682
        %v1684 = vsel %vm1612, %v1653, %v1683
        %v1685 = vsel %vm1615, %v1655, %v1684
        %v1686 = vsel %vm1618, %v1657, %v1685
        %v1687 = vsel %vm1621, %v1597, %v1686
        %1688 = vmatprep.subr.mxu0 0.0
        %1689 = vmatpush1.xpose.msra.mxu0 0.0
        %1690 = vmatprep.subr.mxu0 0.0
        %1691 = vmatpush1.xpose.msra.mxu0 0.0
        %1692 = vmatprep.subr.mxu0 0.0
        %1693 = vmatpush1.xpose.msra.mxu0 0.0
        %1694 = vmatprep.subr.mxu0 0.0
        %1695 = vmatpush1.xpose.msra.mxu0 0.0
        %1696 = vmatprep.subr.mxu0 0.0
        %1697 = vmatpush1.xpose.msra.mxu0 0.0
        %1698 = vmatprep.subr.mxu0 0.0
        %1699 = vmatpush1.xpose.msra.mxu0 0.0
        %1700 = vmatprep.subr.mxu0 0.0
        %1701 = vmatpush1.xpose.msra.mxu0 0.0
        %1702 = vmatprep.subr.mxu0 0.0
        %1703 = vmatpush1.xpose.msra.mxu0 0.0
        %1704 = vmatprep.subr.mxu0 0.0
        %1705 = vmatpush1.xpose.msra.mxu0 0.0
        %1706 = vmatprep.subr.mxu0 0.0
        %1707 = vmatpush1.xpose.msra.mxu0 0.0
        %1708 = vmatprep.subr.mxu0 0.0
        %1709 = vmatpush1.xpose.msra.mxu0 0.0
        %1710 = vmatprep.subr.mxu0 0.0
        %1711 = vmatpush1.xpose.msra.mxu0 0.0
        %1712 = vmatprep.subr.mxu0 0.0
        %1713 = vmatpush1.xpose.msra.mxu0 0.0
        %1714 = vmatprep.subr.mxu0 0.0
        %1715 = vmatpush1.xpose.msra.mxu0 0.0
        %1716 = vmatprep.subr.mxu0 0.0
        %1717 = vmatpush1.xpose.msra.mxu0 0.0
        %1718 = vmatprep.subr.mxu0 0.0
        %1719 = vmatpush1.xpose.msra.mxu0 %v1204
        %1720 = vmatprep.subr.mxu0 0.0
        %1721 = vmatpush2.xpose.msra.mxu0 0.0
        %1722 = vmatprep.subr.mxu0 0.0
        %1723 = vmatpush2.xpose.msra.mxu0 0.0
        %1724 = vmatprep.subr.mxu0 0.0
        %1725 = vmatpush2.xpose.msra.mxu0 0.0
        %1726 = vmatprep.subr.mxu0 0.0
        %1727 = vmatpush2.xpose.msra.mxu0 0.0
        %1728 = vmatprep.subr.mxu0 0.0
        %1729 = vmatpush2.xpose.msra.mxu0 0.0
        %1730 = vmatprep.subr.mxu0 0.0
        %1731 = vmatpush2.xpose.msra.mxu0 0.0
        %1732 = vmatprep.subr.mxu0 0.0
        %1733 = vmatpush2.xpose.msra.mxu0 0.0
        %1734 = vmatprep.subr.mxu0 0.0
        %1735 = vmatpush2.xpose.msra.mxu0 0.0
        %1736 = vmatprep.subr.mxu0 0.0
        %1737 = vmatpush2.xpose.msra.mxu0 0.0
        %1738 = vmatprep.subr.mxu0 0.0
        %1739 = vmatpush2.xpose.msra.mxu0 0.0
        %1740 = vmatprep.subr.mxu0 0.0
        %1741 = vmatpush2.xpose.msra.mxu0 0.0
        %1742 = vmatprep.subr.mxu0 0.0
        %1743 = vmatpush2.xpose.msra.mxu0 0.0
        %1744 = vmatprep.subr.mxu0 0.0
        %1745 = vmatpush2.xpose.msra.mxu0 0.0
        %1746 = vmatprep.subr.mxu0 0.0
        %1747 = vmatpush2.xpose.msra.mxu0 0.0
        %1748 = vmatprep.subr.mxu0 0.0
        %1749 = vmatpush2.xpose.msra.mxu0 0.0
        %1750 = vmatprep.subr.mxu0 0.0
        %1751 = vmatpush2.xpose.msra.mxu0 0.0
        %1752 = vmatprep.mubr.f32.mxu0 0.0
        %1753 = vmatmul.mubr.f32.gmra.mxu0 %v1622
        %v1754 = vpop.f32.mrf.mxu0
        %v1755 = vadd.f32 0.0, %v1754
        %v1756 = vpop.f32.mrf.mxu0
        %1757 = vmatprep.mubr.f32.mxu0 0.0
        %1758 = vmatmul.mubr.f32.gmra.mxu0 %v1637
        %v1759 = vpop.f32.mrf.mxu0
        %v1760 = vadd.f32 0.0, %v1759
        %v1761 = vpop.f32.mrf.mxu0
        %1762 = vmatprep.mubr.f32.mxu0 0.0
        %1763 = vmatmul.mubr.f32.gmra.mxu0 %v1652
        %v1764 = vpop.f32.mrf.mxu0
        %v1765 = vadd.f32 0.0, %v1764
        %v1766 = vpop.f32.mrf.mxu0
        %1767 = vmatprep.mubr.f32.mxu0 0.0
        %1768 = vmatmul.mubr.f32.gmra.mxu0 %v1663
        %v1769 = vpop.f32.mrf.mxu0
        %v1770 = vadd.f32 0.0, %v1769
        %v1771 = vpop.f32.mrf.mxu0
        %1772 = vmatprep.mubr.f32.mxu0 0.0
        %1773 = vmatmul.mubr.f32.gmra.mxu0 %v1671
        %v1774 = vpop.f32.mrf.mxu0
        %v1775 = vadd.f32 0.0, %v1774
        %v1776 = vpop.f32.mrf.mxu0
        %1777 = vmatprep.mubr.f32.mxu0 0.0
        %1778 = vmatmul.mubr.f32.gmra.mxu0 %v1679
        %v1779 = vpop.f32.mrf.mxu0
        %v1780 = vadd.f32 0.0, %v1779
        %v1781 = vpop.f32.mrf.mxu0
        %1782 = vmatprep.mubr.f32.mxu0 0.0
        %1783 = vmatmul.mubr.f32.gmra.mxu0 %v1687
        %v1784 = vpop.f32.mrf.mxu0
        %v1785 = vadd.f32 0.0, %v1784
        %v1786 = vpop.f32.mrf.mxu0
        %1787 = vdwg.mxu0
        %1788 = vst [vmem:[%s570] sm:$0xff] %v1755
        %1789 = vst [vmem:[%s570 + $0x8] sm:$0xff] %v1760
        %1790 = vst [vmem:[%s570 + $0x10] sm:$0xff] %v1765
        %1791 = vst [vmem:[%s570 + $0x18] sm:$0xff] %v1770
        %1792 = vst [vmem:[%s570 + $0x20] sm:$0xff] %v1775
        %1793 = vst [vmem:[%s570 + $0x28] sm:$0xff] %v1780
        %1794 = vst [vmem:[%s570 + $0x30] sm:$0xff] %v1785
        %s1795 = sand.u32 %s374, 1
        %s1796 = scalar_lea.sflag [#allocation4], %s1795
        %s1797 = sand.u32 %s374, 1
        %s1798 = smul.addr %s1797, 56
        %s1799 = scalar_lea.vmem [#allocation8], %s1798
        // Predicated region
        $region93: #{tpu_custom_call.1} parent=79 // pred_check
          %p1800 = pneg %p384
        $region94: #{tpu_custom_call.1} parent=79 // pred_check_branch
          %1802 = sbr.rel (%p1800) target = $region96
        $region95: #{tpu_custom_call.1} parent=79 // pred_region
          %s1804 = ssub.s32 896, 896
          %1805 = vsyncadd %s1796, %s1804
          %s1806 = smul.addr %s31, 7
          %s1807 = smul.addr %s1806, 128
          %s1808 = scalar_lea.hbm %s15, %s1807
          %s1809 = sshll.u32 %s1799, 4
          %s1810 = int_to_ptr.vmem [resolvable:$true] %s1809
          %1815 = dma.vmem_to_hbm [thread:$0]  %s1810, 896, %s1808, %s1796, 128, 128, 8
        $region96: #{tpu_custom_call.1} parent=79 // pred_fallthru
          _
      $region80: #{tpu_custom_call.1} parent=5 // pred_fallthru
        _
      %p1816 = scmp.le.s32.totalorder 2, %s26
      // Predicated region
      $region97: #{tpu_custom_call.1} parent=5 // pred_check
        %p1817 = pneg %p1816
      $region98: #{tpu_custom_call.1} parent=5 // pred_check_branch
        %1819 = sbr.rel (%p1817) target = $region100
      $region99: #{tpu_custom_call.1} parent=5 // pred_region
        %s1820 = ssub.s32 %s26, 2
        // Predicated region
        $region101: #{tpu_custom_call.1} parent=99 // pred_check
          %p1821 = pneg %p390
        $region102: #{tpu_custom_call.1} parent=99 // pred_check_branch
          %1823 = sbr.rel (%p1821) target = $region104
        $region103: #{tpu_custom_call.1} parent=99 // pred_region
          %s1824 = sand.u32 %s375, 1
          %s1825 = scalar_lea.sflag [#allocation4], %s1824
          %s1826 = sand.u32 %s375, 1
          %s1827 = smul.addr %s1826, 56
          %s1828 = scalar_lea.vmem [#allocation8], %s1827
          %1829 = dma.done %s1825, 896
        $region104: #{tpu_custom_call.1} parent=99 // pred_fallthru
          _
      $region100: #{tpu_custom_call.1} parent=5 // pred_fallthru
        _
    $region6: #{tpu_custom_call.1} parent=1 // loop_footer
      %s30 = sadd.s32 1, %s26
    $region7: #{tpu_custom_call.1} parent=1 // loop_footer_branch
      %25 = sbr.rel target = $region3
    $region8: #{tpu_custom_call.1} parent=1 // loop_exit
      _
    %1830 = vsyncpa [#allocation3], 1
    %s1831 = scalar_lea.sflag [#allocation3], 1
    %1832 = vsyncpa %s1831, 1
    %1833 = vsyncpa [#allocation6], 1
    %1834 = vsyncpa [#allocation4], 1
    %s1835 = scalar_lea.sflag [#allocation4], 1
    %1836 = vsyncpa %s1835, 1

</llo_original>
